<compile_context>
chip_gen: v5e
topology: v5e:2x2
jax: 0.10.0
libtpu: 0.0.40
codegen_flags: <defaults>
</compile_context>

<pallas_src>
import functools

import jax
import jax.numpy as jnp
from jax.experimental import pallas as pl
from jax.experimental.pallas import tpu as pltpu

_LANE = 128
_SUBLANE = 8


def _round_up(x, m):
    return ((x + m - 1) // m) * m


# --------------------------------------------------------------------------
# Kernel
# --------------------------------------------------------------------------
def _autoencoder_kernel(x_ref,
                        w1_ref, b1_ref,
                        w2_ref, b2_ref,
                        w3_ref, b3_ref,
                        w4_ref, b4_ref,
                        o_ref):
    """Fused 4x (matmul + bias + activation) for one batch tile, all in VMEM."""
    dot = functools.partial(jnp.dot,
                            preferred_element_type=jnp.float32,
                            precision=jax.lax.Precision.HIGHEST)
    x = x_ref[...]

    # encoder: Linear -> ReLU -> Linear -> ReLU
    h1 = jnp.maximum(dot(x, w1_ref[...]) + b1_ref[...], 0.0)
    z = jnp.maximum(dot(h1, w2_ref[...]) + b2_ref[...], 0.0)

    # decoder: Linear -> ReLU -> Linear -> Tanh
    h2 = jnp.maximum(dot(z, w3_ref[...]) + b3_ref[...], 0.0)
    o_ref[...] = jnp.tanh(dot(h2, w4_ref[...]) + b4_ref[...])


# --------------------------------------------------------------------------
# One-time weight preparation (off the hot path)
# --------------------------------------------------------------------------
def prepare_params(params):
    """Transpose PyTorch (out,in) weights to (in,out) and zero-pad only the
    internal hidden/latent dims to 128 lanes.  The input/output feature dim is
    left at its real width (full-extent blocks are legal; avoids extra HBM
    pad/slice passes).  Zero padding is exact: padded weight rows/cols and
    bias entries are 0, so padded activations stay 0 through ReLU."""
    in_d = params["w1"].shape[1]
    hid_d = params["w1"].shape[0]
    lat_d = params["w2"].shape[0]
    hid_p = _round_up(hid_d, _LANE)
    lat_p = _round_up(lat_d, _LANE)
    # TODO(synk): on v6e/v7x (2x256 MXU) pad hidden/latent to 256 once the real
    # dims are >= 128; 128 keeps zero-FLOP waste low for small models and v5e.

    def prep_w(w, rows_p, cols_p):
        wt = jnp.asarray(w, jnp.float32).T  # (in, out)
        return jnp.pad(wt, ((0, rows_p - wt.shape[0]), (0, cols_p - wt.shape[1])))

    def prep_b(b, cols_p):
        b2d = jnp.asarray(b, jnp.float32).reshape(1, -1)
        return jnp.pad(b2d, ((0, 0), (0, cols_p - b2d.shape[1])))

    return {
        "w1": prep_w(params["w1"], in_d, hid_p), "b1": prep_b(params["b1"], hid_p),
        "w2": prep_w(params["w2"], hid_p, lat_p), "b2": prep_b(params["b2"], lat_p),
        "w3": prep_w(params["w3"], lat_p, hid_p), "b3": prep_b(params["b3"], hid_p),
        "w4": prep_w(params["w4"], hid_p, in_d), "b4": prep_b(params["b4"], in_d),
    }


# --------------------------------------------------------------------------
# Sizing helpers
# --------------------------------------------------------------------------
def _vmem_capacity_bytes():
    try:
        return int(pltpu.get_tpu_info().vmem_capacity_bytes)
    except Exception:
        return 64 << 20  # conservative: v7x per-TensorCore VMEM


def _choose_batch_tile(batch, in_dim, target_tile_bytes):
    """Rows per grid step: large enough for ~target-sized f32 I/O tiles
    (amortizes the ~0.35us per-step overhead), but at least two grid steps
    when the batch permits so v7x's second TensorCore is never idle."""
    rows = (target_tile_bytes // (4 * max(in_dim, 1))) // _SUBLANE * _SUBLANE
    rows = max(rows, _SUBLANE)
    if batch >= 2 * _SUBLANE:
        half = _round_up((batch + 1) // 2, _SUBLANE)
        rows = min(rows, max(_SUBLANE, half))
    if rows >= batch:
        return batch  # single full-extent tile (always a legal block shape)
    return rows       # multiple of 8; trailing partial block is masked


# --------------------------------------------------------------------------
# Forward
# --------------------------------------------------------------------------
@functools.partial(jax.jit,
                   static_argnames=("single_buffer_weights", "target_tile_bytes"))
def _forward_impl(x, prepped, *, single_buffer_weights, target_tile_bytes):
    B, in_dim = x.shape
    w1, b1 = prepped["w1"], prepped["b1"]
    w2, b2 = prepped["w2"], prepped["b2"]
    w3, b3 = prepped["w3"], prepped["b3"]
    w4, b4 = prepped["w4"], prepped["b4"]
    assert w1.shape[0] == in_dim, "prepped params do not match input feature dim"
    hid_p = w1.shape[1]
    lat_p = w2.shape[1]

    tb = _choose_batch_tile(B, in_dim, target_tile_bytes)
    nb = pl.cdiv(B, tb)

    if single_buffer_weights:
        # Constant (grid-invariant) operands: no point double-buffering them.
        def const(shape):
            return pl.BlockSpec(shape, lambda i: (0, 0),
                                pipeline_mode=pl.Buffered(1))
    else:
        def const(shape):
            return pl.BlockSpec(shape, lambda i: (0, 0))

    batch_spec = pl.BlockSpec((tb, in_dim), lambda i: (i, 0))

    # Explicit VMEM budget: resident weights (x buffer factor), double-buffered
    # x/out tiles, and intermediate-activation scratch -- capped per-generation
    # at ~75% of physical VMEM (64 MiB on v7x, 128 MiB on v5e/v6e).
    f32 = 4
    weight_bytes = f32 * (w1.size + w2.size + w3.size + w4.size
                          + b1.size + b2.size + b3.size + b4.size)
    weight_factor = 1 if single_buffer_weights else 2
    io_bytes = f32 * 2 * 2 * tb * in_dim                  # x + out, double-buffered
    act_bytes = f32 * tb * (2 * hid_p + lat_p + in_dim)   # h1, z, h2, pre-tanh
    needed = weight_factor * weight_bytes + io_bytes + act_bytes + (4 << 20)
    cap = int(0.75 * _vmem_capacity_bytes())
    vmem_limit = max(1 << 20, min(cap, needed))

    cost = pl.CostEstimate(
        flops=2 * B * (in_dim * hid_p + hid_p * lat_p
                       + lat_p * hid_p + hid_p * in_dim),
        transcendentals=B * in_dim,
        bytes_accessed=weight_bytes + f32 * 2 * B * in_dim,
    )

    return pl.pallas_call(
        _autoencoder_kernel,
        out_shape=jax.ShapeDtypeStruct((B, in_dim), jnp.float32),
        grid=(nb,),
        in_specs=[
            batch_spec,
            const((in_dim, hid_p)), const((1, hid_p)),
            const((hid_p, lat_p)), const((1, lat_p)),
            const((lat_p, hid_p)), const((1, hid_p)),
            const((hid_p, in_dim)), const((1, in_dim)),
        ],
        out_specs=batch_spec,
        compiler_params=pltpu.CompilerParams(
            dimension_semantics=("parallel",),
            vmem_limit_bytes=int(vmem_limit),
        ),
        cost_estimate=cost,
    )(x, w1, b1, w2, b2, w3, b3, w4, b4)


def genshin_autoencoder_forward(x, prepped, *, target_tile_bytes=2 << 20):
    """x: (batch, input_dim) f32. prepped: output of prepare_params()."""
    try:
        return _forward_impl(x, prepped, single_buffer_weights=True,
                             target_tile_bytes=target_tile_bytes)
    except Exception:
        # pl.Buffered(1) (single-buffered constant operands) not supported on
        # this jax version; fall back to default double-buffered weight specs.
        return _forward_impl(x, prepped, single_buffer_weights=False,
                             target_tile_bytes=target_tile_bytes)


# --------------------------------------------------------------------------
# Params / reference
# --------------------------------------------------------------------------
def init_params(key, input_dim):
    """Deterministic init with the same shapes nn.Linear would create."""
    hidden_dim = max(input_dim // 2, 2)
    latent_dim = max(hidden_dim // 2, 1)
    keys = jax.random.split(key, 8)

    def linear_init(kw, kb, out_d, in_d):
        bound = 1.0 / jnp.sqrt(jnp.float32(in_d))
        w = jax.random.uniform(kw, (out_d, in_d), jnp.float32, -bound, bound)
        b = jax.random.uniform(kb, (out_d,), jnp.float32, -bound, bound)
        return w, b

    w1, b1 = linear_init(keys[0], keys[1], hidden_dim, input_dim)
    w2, b2 = linear_init(keys[2], keys[3], latent_dim, hidden_dim)
    w3, b3 = linear_init(keys[4], keys[5], hidden_dim, latent_dim)
    w4, b4 = linear_init(keys[6], keys[7], input_dim, hidden_dim)
    return {"w1": w1, "b1": b1, "w2": w2, "b2": b2,
            "w3": w3, "b3": b3, "w4": w4, "b4": b4}


def reference_forward(x, params):
    """Pure-JAX reference matching the PyTorch module (fp32 precision)."""
    hp = jax.lax.Precision.HIGHEST
    h = jnp.maximum(jnp.dot(x, params["w1"].T, precision=hp) + params["b1"], 0.0)
    z = jnp.maximum(jnp.dot(h, params["w2"].T, precision=hp) + params["b2"], 0.0)
    h2 = jnp.maximum(jnp.dot(z, params["w3"].T, precision=hp) + params["b3"], 0.0)
    return jnp.tanh(jnp.dot(h2, params["w4"].T, precision=hp) + params["b4"])


if __name__ == "__main__":
    key = jax.random.PRNGKey(0)
    k_param, k_x = jax.random.split(key)

    batch = 8
    input_dim = 32  # -> hidden=16, latent=8

    params = init_params(k_param, input_dim)
    prepped = prepare_params(params)          # one-time weight prep (off hot path)
    x = jax.random.normal(k_x, (batch, input_dim), jnp.float32)

    out = jax.block_until_ready(genshin_autoencoder_forward(x, prepped))
    ref = reference_forward(x, params)

    assert out.shape == (batch, input_dim)
    assert jnp.allclose(out, ref, atol=1e-5, rtol=1e-5), "mismatch vs reference"

    print("KERNEL_OK")
</pallas_src>

<mosaic_0001>
module attributes {stable_mosaic.version = 11 : i64} {
  func.func @_autoencoder_kernel(%arg0: i32, %arg1: memref<8x32xf32, #tpu.memory_space<vmem>>, %arg2: memref<32x128xf32, #tpu.memory_space<vmem>>, %arg3: memref<1x128xf32, #tpu.memory_space<vmem>>, %arg4: memref<128x128xf32, #tpu.memory_space<vmem>>, %arg5: memref<1x128xf32, #tpu.memory_space<vmem>>, %arg6: memref<128x128xf32, #tpu.memory_space<vmem>>, %arg7: memref<1x128xf32, #tpu.memory_space<vmem>>, %arg8: memref<128x32xf32, #tpu.memory_space<vmem>>, %arg9: memref<1x32xf32, #tpu.memory_space<vmem>>, %arg10: memref<8x32xf32, #tpu.memory_space<vmem>>) attributes {dimension_semantics = [#tpu.dimension_semantics<parallel>], iteration_bounds = array<i64: 1>, scalar_prefetch = 0 : i64, scratch_operands = 0 : i64, tpu.core_type = #tpu.core_type<tc>, window_params = [{transform_indices = @transform_0, window_bounds = array<i64: 8, 32>}, {pipeline_mode = #tpu.pipeline_mode<synchronous>, transform_indices = @transform_1, window_bounds = array<i64: 32, 128>}, {pipeline_mode = #tpu.pipeline_mode<synchronous>, transform_indices = @transform_2, window_bounds = array<i64: 1, 128>}, {pipeline_mode = #tpu.pipeline_mode<synchronous>, transform_indices = @transform_3, window_bounds = array<i64: 128, 128>}, {pipeline_mode = #tpu.pipeline_mode<synchronous>, transform_indices = @transform_4, window_bounds = array<i64: 1, 128>}, {pipeline_mode = #tpu.pipeline_mode<synchronous>, transform_indices = @transform_5, window_bounds = array<i64: 128, 128>}, {pipeline_mode = #tpu.pipeline_mode<synchronous>, transform_indices = @transform_6, window_bounds = array<i64: 1, 128>}, {pipeline_mode = #tpu.pipeline_mode<synchronous>, transform_indices = @transform_7, window_bounds = array<i64: 128, 32>}, {pipeline_mode = #tpu.pipeline_mode<synchronous>, transform_indices = @transform_8, window_bounds = array<i64: 1, 32>}, {transform_indices = @transform_9, window_bounds = array<i64: 8, 32>}]} {
    %c0 = arith.constant 0 : index
    %c0_0 = arith.constant 0 : index
    %0 = vector.load %arg1[%c0, %c0_0] : memref<8x32xf32, #tpu.memory_space<vmem>>, vector<8x32xf32>
    %c0_1 = arith.constant 0 : index
    %c0_2 = arith.constant 0 : index
    %1 = vector.load %arg2[%c0_1, %c0_2] : memref<32x128xf32, #tpu.memory_space<vmem>>, vector<32x128xf32>
    %cst = arith.constant dense<0.000000e+00> : vector<8x128xf32>
    %2 = tpu.matmul %0, %1, %cst {dimension_numbers = #tpu.dot_dimension_numbers<[1], [0], [0], [1], [0, 0, 1, 1], [], []>, precision = #tpu.contract_precision<fp32>} : vector<8x32xf32>, vector<32x128xf32>, vector<8x128xf32> -> vector<8x128xf32>
    %c0_3 = arith.constant 0 : index
    %c0_4 = arith.constant 0 : index
    %3 = vector.load %arg3[%c0_3, %c0_4] : memref<1x128xf32, #tpu.memory_space<vmem>>, vector<1x128xf32>
    %4 = vector.broadcast %3 : vector<1x128xf32> to vector<8x128xf32>
    %5 = arith.addf %2, %4 : vector<8x128xf32>
    %cst_5 = arith.constant 0.000000e+00 : f32
    %6 = vector.broadcast %cst_5 : f32 to vector<8x128xf32>
    %7 = arith.maximumf %5, %6 : vector<8x128xf32>
    %c0_6 = arith.constant 0 : index
    %c0_7 = arith.constant 0 : index
    %8 = vector.load %arg4[%c0_6, %c0_7] : memref<128x128xf32, #tpu.memory_space<vmem>>, vector<128x128xf32>
    %cst_8 = arith.constant dense<0.000000e+00> : vector<8x128xf32>
    %9 = tpu.matmul %7, %8, %cst_8 {dimension_numbers = #tpu.dot_dimension_numbers<[1], [0], [0], [1], [0, 0, 1, 1], [], []>, precision = #tpu.contract_precision<fp32>} : vector<8x128xf32>, vector<128x128xf32>, vector<8x128xf32> -> vector<8x128xf32>
    %c0_9 = arith.constant 0 : index
    %c0_10 = arith.constant 0 : index
    %10 = vector.load %arg5[%c0_9, %c0_10] : memref<1x128xf32, #tpu.memory_space<vmem>>, vector<1x128xf32>
    %11 = vector.broadcast %10 : vector<1x128xf32> to vector<8x128xf32>
    %12 = arith.addf %9, %11 : vector<8x128xf32>
    %cst_11 = arith.constant 0.000000e+00 : f32
    %13 = vector.broadcast %cst_11 : f32 to vector<8x128xf32>
    %14 = arith.maximumf %12, %13 : vector<8x128xf32>
    %c0_12 = arith.constant 0 : index
    %c0_13 = arith.constant 0 : index
    %15 = vector.load %arg6[%c0_12, %c0_13] : memref<128x128xf32, #tpu.memory_space<vmem>>, vector<128x128xf32>
    %cst_14 = arith.constant dense<0.000000e+00> : vector<8x128xf32>
    %16 = tpu.matmul %14, %15, %cst_14 {dimension_numbers = #tpu.dot_dimension_numbers<[1], [0], [0], [1], [0, 0, 1, 1], [], []>, precision = #tpu.contract_precision<fp32>} : vector<8x128xf32>, vector<128x128xf32>, vector<8x128xf32> -> vector<8x128xf32>
    %c0_15 = arith.constant 0 : index
    %c0_16 = arith.constant 0 : index
    %17 = vector.load %arg7[%c0_15, %c0_16] : memref<1x128xf32, #tpu.memory_space<vmem>>, vector<1x128xf32>
    %18 = vector.broadcast %17 : vector<1x128xf32> to vector<8x128xf32>
    %19 = arith.addf %16, %18 : vector<8x128xf32>
    %cst_17 = arith.constant 0.000000e+00 : f32
    %20 = vector.broadcast %cst_17 : f32 to vector<8x128xf32>
    %21 = arith.maximumf %19, %20 : vector<8x128xf32>
    %c0_18 = arith.constant 0 : index
    %c0_19 = arith.constant 0 : index
    %22 = vector.load %arg8[%c0_18, %c0_19] : memref<128x32xf32, #tpu.memory_space<vmem>>, vector<128x32xf32>
    %cst_20 = arith.constant dense<0.000000e+00> : vector<8x32xf32>
    %23 = tpu.matmul %21, %22, %cst_20 {dimension_numbers = #tpu.dot_dimension_numbers<[1], [0], [0], [1], [0, 0, 1, 1], [], []>, precision = #tpu.contract_precision<fp32>} : vector<8x128xf32>, vector<128x32xf32>, vector<8x32xf32> -> vector<8x32xf32>
    %c0_21 = arith.constant 0 : index
    %c0_22 = arith.constant 0 : index
    %24 = vector.load %arg9[%c0_21, %c0_22] : memref<1x32xf32, #tpu.memory_space<vmem>>, vector<1x32xf32>
    %25 = vector.broadcast %24 : vector<1x32xf32> to vector<8x32xf32>
    %26 = arith.addf %23, %25 : vector<8x32xf32>
    %27 = math.tanh %26 : vector<8x32xf32>
    %c0_23 = arith.constant 0 : index
    %c0_24 = arith.constant 0 : index
    %28 = vector.load %arg10[%c0_23, %c0_24] : memref<8x32xf32, #tpu.memory_space<vmem>>, vector<8x32xf32>
    tpu.vector_store %arg10[%c0_23, %c0_24], %27 {strides = array<i32>} : memref<8x32xf32, #tpu.memory_space<vmem>>, vector<8x32xf32>,
    return
  }
  func.func @transform_0(%arg0: i32) -> (i32, i32) {
    %c0_i32 = arith.constant 0 : i32
    %c0_i32_0 = arith.constant 0 : i32
    return %arg0, %c0_i32 : i32, i32
  }
  func.func @transform_1(%arg0: i32) -> (i32, i32) {
    %c0_i32 = arith.constant 0 : i32
    %c0_i32_0 = arith.constant 0 : i32
    %c0_i32_1 = arith.constant 0 : i32
    return %c0_i32, %c0_i32_0 : i32, i32
  }
  func.func @transform_2(%arg0: i32) -> (i32, i32) {
    %c0_i32 = arith.constant 0 : i32
    %c0_i32_0 = arith.constant 0 : i32
    %c0_i32_1 = arith.constant 0 : i32
    return %c0_i32, %c0_i32_0 : i32, i32
  }
  func.func @transform_3(%arg0: i32) -> (i32, i32) {
    %c0_i32 = arith.constant 0 : i32
    %c0_i32_0 = arith.constant 0 : i32
    %c0_i32_1 = arith.constant 0 : i32
    return %c0_i32, %c0_i32_0 : i32, i32
  }
  func.func @transform_4(%arg0: i32) -> (i32, i32) {
    %c0_i32 = arith.constant 0 : i32
    %c0_i32_0 = arith.constant 0 : i32
    %c0_i32_1 = arith.constant 0 : i32
    return %c0_i32, %c0_i32_0 : i32, i32
  }
  func.func @transform_5(%arg0: i32) -> (i32, i32) {
    %c0_i32 = arith.constant 0 : i32
    %c0_i32_0 = arith.constant 0 : i32
    %c0_i32_1 = arith.constant 0 : i32
    return %c0_i32, %c0_i32_0 : i32, i32
  }
  func.func @transform_6(%arg0: i32) -> (i32, i32) {
    %c0_i32 = arith.constant 0 : i32
    %c0_i32_0 = arith.constant 0 : i32
    %c0_i32_1 = arith.constant 0 : i32
    return %c0_i32, %c0_i32_0 : i32, i32
  }
  func.func @transform_7(%arg0: i32) -> (i32, i32) {
    %c0_i32 = arith.constant 0 : i32
    %c0_i32_0 = arith.constant 0 : i32
    %c0_i32_1 = arith.constant 0 : i32
    return %c0_i32, %c0_i32_0 : i32, i32
  }
  func.func @transform_8(%arg0: i32) -> (i32, i32) {
    %c0_i32 = arith.constant 0 : i32
    %c0_i32_0 = arith.constant 0 : i32
    %c0_i32_1 = arith.constant 0 : i32
    return %c0_i32, %c0_i32_0 : i32, i32
  }
  func.func @transform_9(%arg0: i32) -> (i32, i32) {
    %c0_i32 = arith.constant 0 : i32
    %c0_i32_0 = arith.constant 0 : i32
    return %arg0, %c0_i32 : i32, i32
  }
}

module attributes {stable_mosaic.version = 11 : i64} {
  func.func @_autoencoder_kernel(%arg0: i32, %arg1: memref<8x32xf32, #tpu.memory_space<vmem>>, %arg2: memref<32x128xf32, #tpu.memory_space<vmem>>, %arg3: memref<1x128xf32, #tpu.memory_space<vmem>>, %arg4: memref<128x128xf32, #tpu.memory_space<vmem>>, %arg5: memref<1x128xf32, #tpu.memory_space<vmem>>, %arg6: memref<128x128xf32, #tpu.memory_space<vmem>>, %arg7: memref<1x128xf32, #tpu.memory_space<vmem>>, %arg8: memref<128x32xf32, #tpu.memory_space<vmem>>, %arg9: memref<1x32xf32, #tpu.memory_space<vmem>>, %arg10: memref<8x32xf32, #tpu.memory_space<vmem>>) attributes {dimension_semantics = [#tpu.dimension_semantics<parallel>], iteration_bounds = array<i64: 1>, scalar_prefetch = 0 : i64, scratch_operands = 0 : i64, tpu.core_type = #tpu.core_type<tc>, window_params = [{transform_indices = @transform_0, window_bounds = array<i64: 8, 32>}, {pipeline_mode = #tpu.pipeline_mode<synchronous>, transform_indices = @transform_1, window_bounds = array<i64: 32, 128>}, {pipeline_mode = #tpu.pipeline_mode<synchronous>, transform_indices = @transform_2, window_bounds = array<i64: 1, 128>}, {pipeline_mode = #tpu.pipeline_mode<synchronous>, transform_indices = @transform_3, window_bounds = array<i64: 128, 128>}, {pipeline_mode = #tpu.pipeline_mode<synchronous>, transform_indices = @transform_4, window_bounds = array<i64: 1, 128>}, {pipeline_mode = #tpu.pipeline_mode<synchronous>, transform_indices = @transform_5, window_bounds = array<i64: 128, 128>}, {pipeline_mode = #tpu.pipeline_mode<synchronous>, transform_indices = @transform_6, window_bounds = array<i64: 1, 128>}, {pipeline_mode = #tpu.pipeline_mode<synchronous>, transform_indices = @transform_7, window_bounds = array<i64: 128, 32>}, {pipeline_mode = #tpu.pipeline_mode<synchronous>, transform_indices = @transform_8, window_bounds = array<i64: 1, 32>}, {transform_indices = @transform_9, window_bounds = array<i64: 8, 32>}]} {
    %c0 = arith.constant 0 : index
    %c0_0 = arith.constant 0 : index
    %0 = vector.load %arg1[%c0, %c0_0] : memref<8x32xf32, #tpu.memory_space<vmem>>, vector<8x32xf32>
    %c0_1 = arith.constant 0 : index
    %c0_2 = arith.constant 0 : index
    %1 = vector.load %arg2[%c0_1, %c0_2] : memref<32x128xf32, #tpu.memory_space<vmem>>, vector<32x128xf32>
    %cst = arith.constant dense<0.000000e+00> : vector<8x128xf32>
    %2 = tpu.matmul %0, %1, %cst {dimension_numbers = #tpu.dot_dimension_numbers<[1], [0], [0], [1], [0, 0, 1, 1], [], []>, precision = #tpu.contract_precision<fp32>} : vector<8x32xf32>, vector<32x128xf32>, vector<8x128xf32> -> vector<8x128xf32>
    %c0_3 = arith.constant 0 : index
    %c0_4 = arith.constant 0 : index
    %3 = vector.load %arg3[%c0_3, %c0_4] : memref<1x128xf32, #tpu.memory_space<vmem>>, vector<1x128xf32>
    %4 = vector.broadcast %3 : vector<1x128xf32> to vector<8x128xf32>
    %5 = arith.addf %2, %4 : vector<8x128xf32>
    %cst_5 = arith.constant 0.000000e+00 : f32
    %6 = vector.broadcast %cst_5 : f32 to vector<8x128xf32>
    %7 = arith.maximumf %5, %6 : vector<8x128xf32>
    %c0_6 = arith.constant 0 : index
    %c0_7 = arith.constant 0 : index
    %8 = vector.load %arg4[%c0_6, %c0_7] : memref<128x128xf32, #tpu.memory_space<vmem>>, vector<128x128xf32>
    %cst_8 = arith.constant dense<0.000000e+00> : vector<8x128xf32>
    %9 = tpu.matmul %7, %8, %cst_8 {dimension_numbers = #tpu.dot_dimension_numbers<[1], [0], [0], [1], [0, 0, 1, 1], [], []>, precision = #tpu.contract_precision<fp32>} : vector<8x128xf32>, vector<128x128xf32>, vector<8x128xf32> -> vector<8x128xf32>
    %c0_9 = arith.constant 0 : index
    %c0_10 = arith.constant 0 : index
    %10 = vector.load %arg5[%c0_9, %c0_10] : memref<1x128xf32, #tpu.memory_space<vmem>>, vector<1x128xf32>
    %11 = vector.broadcast %10 : vector<1x128xf32> to vector<8x128xf32>
    %12 = arith.addf %9, %11 : vector<8x128xf32>
    %cst_11 = arith.constant 0.000000e+00 : f32
    %13 = vector.broadcast %cst_11 : f32 to vector<8x128xf32>
    %14 = arith.maximumf %12, %13 : vector<8x128xf32>
    %c0_12 = arith.constant 0 : index
    %c0_13 = arith.constant 0 : index
    %15 = vector.load %arg6[%c0_12, %c0_13] : memref<128x128xf32, #tpu.memory_space<vmem>>, vector<128x128xf32>
    %cst_14 = arith.constant dense<0.000000e+00> : vector<8x128xf32>
    %16 = tpu.matmul %14, %15, %cst_14 {dimension_numbers = #tpu.dot_dimension_numbers<[1], [0], [0], [1], [0, 0, 1, 1], [], []>, precision = #tpu.contract_precision<fp32>} : vector<8x128xf32>, vector<128x128xf32>, vector<8x128xf32> -> vector<8x128xf32>
    %c0_15 = arith.constant 0 : index
    %c0_16 = arith.constant 0 : index
    %17 = vector.load %arg7[%c0_15, %c0_16] : memref<1x128xf32, #tpu.memory_space<vmem>>, vector<1x128xf32>
    %18 = vector.broadcast %17 : vector<1x128xf32> to vector<8x128xf32>
    %19 = arith.addf %16, %18 : vector<8x128xf32>
    %cst_17 = arith.constant 0.000000e+00 : f32
    %20 = vector.broadcast %cst_17 : f32 to vector<8x128xf32>
    %21 = arith.maximumf %19, %20 : vector<8x128xf32>
    %c0_18 = arith.constant 0 : index
    %c0_19 = arith.constant 0 : index
    %22 = vector.load %arg8[%c0_18, %c0_19] : memref<128x32xf32, #tpu.memory_space<vmem>>, vector<128x32xf32>
    %cst_20 = arith.constant dense<0.000000e+00> : vector<8x32xf32>
    %23 = tpu.matmul %21, %22, %cst_20 {dimension_numbers = #tpu.dot_dimension_numbers<[1], [0], [0], [1], [0, 0, 1, 1], [], []>, precision = #tpu.contract_precision<fp32>} : vector<8x128xf32>, vector<128x32xf32>, vector<8x32xf32> -> vector<8x32xf32>
    %c0_21 = arith.constant 0 : index
    %c0_22 = arith.constant 0 : index
    %24 = vector.load %arg9[%c0_21, %c0_22] : memref<1x32xf32, #tpu.memory_space<vmem>>, vector<1x32xf32>
    %25 = vector.broadcast %24 : vector<1x32xf32> to vector<8x32xf32>
    %26 = arith.addf %23, %25 : vector<8x32xf32>
    %27 = math.tanh %26 : vector<8x32xf32>
    %c0_23 = arith.constant 0 : index
    %c0_24 = arith.constant 0 : index
    %28 = vector.load %arg10[%c0_23, %c0_24] : memref<8x32xf32, #tpu.memory_space<vmem>>, vector<8x32xf32>
    tpu.vector_store %arg10[%c0_23, %c0_24], %27 {strides = array<i32>} : memref<8x32xf32, #tpu.memory_space<vmem>>, vector<8x32xf32>,
    return
  }
  func.func @transform_0(%arg0: i32) -> (i32, i32) {
    %c0_i32 = arith.constant 0 : i32
    %c0_i32_0 = arith.constant 0 : i32
    return %arg0, %c0_i32 : i32, i32
  }
  func.func @transform_1(%arg0: i32) -> (i32, i32) {
    %c0_i32 = arith.constant 0 : i32
    %c0_i32_0 = arith.constant 0 : i32
    %c0_i32_1 = arith.constant 0 : i32
    return %c0_i32, %c0_i32_0 : i32, i32
  }
  func.func @transform_2(%arg0: i32) -> (i32, i32) {
    %c0_i32 = arith.constant 0 : i32
    %c0_i32_0 = arith.constant 0 : i32
    %c0_i32_1 = arith.constant 0 : i32
    return %c0_i32, %c0_i32_0 : i32, i32
  }
  func.func @transform_3(%arg0: i32) -> (i32, i32) {
    %c0_i32 = arith.constant 0 : i32
    %c0_i32_0 = arith.constant 0 : i32
    %c0_i32_1 = arith.constant 0 : i32
    return %c0_i32, %c0_i32_0 : i32, i32
  }
  func.func @transform_4(%arg0: i32) -> (i32, i32) {
    %c0_i32 = arith.constant 0 : i32
    %c0_i32_0 = arith.constant 0 : i32
    %c0_i32_1 = arith.constant 0 : i32
    return %c0_i32, %c0_i32_0 : i32, i32
  }
  func.func @transform_5(%arg0: i32) -> (i32, i32) {
    %c0_i32 = arith.constant 0 : i32
    %c0_i32_0 = arith.constant 0 : i32
    %c0_i32_1 = arith.constant 0 : i32
    return %c0_i32, %c0_i32_0 : i32, i32
  }
  func.func @transform_6(%arg0: i32) -> (i32, i32) {
    %c0_i32 = arith.constant 0 : i32
    %c0_i32_0 = arith.constant 0 : i32
    %c0_i32_1 = arith.constant 0 : i32
    return %c0_i32, %c0_i32_0 : i32, i32
  }
  func.func @transform_7(%arg0: i32) -> (i32, i32) {
    %c0_i32 = arith.constant 0 : i32
    %c0_i32_0 = arith.constant 0 : i32
    %c0_i32_1 = arith.constant 0 : i32
    return %c0_i32, %c0_i32_0 : i32, i32
  }
  func.func @transform_8(%arg0: i32) -> (i32, i32) {
    %c0_i32 = arith.constant 0 : i32
    %c0_i32_0 = arith.constant 0 : i32
    %c0_i32_1 = arith.constant 0 : i32
    return %c0_i32, %c0_i32_0 : i32, i32
  }
  func.func @transform_9(%arg0: i32) -> (i32, i32) {
    %c0_i32 = arith.constant 0 : i32
    %c0_i32_0 = arith.constant 0 : i32
    return %arg0, %c0_i32 : i32, i32
  }
}

</mosaic_0001>

<llo_original>
// kernel: _forward_impl.1
$region0: #{_forward_impl.1}
  #allocation0 [shape = 'u32[]', space=smem, size = 0x4, offset = 0x4, fixed_abs, tag = 'smem constant byte address 0x4 - core index']
  #allocation1 [shape = 'u32[72,128]{1,0:T(1,128)}', space=vmem, size = 0x9000, scoped, tag = 'internal scratch']
  %s0 = inlined_call_operand.hbm [shape: f32[8,32], index: 0, kind: input, shape index: {}]
  %s1 = inlined_call_operand.vmem [shape: f32[32,128], index: 1, kind: input, shape index: {}]
  %s2 = inlined_call_operand.vmem [shape: f32[1,128], index: 2, kind: input, shape index: {}]
  %s3 = inlined_call_operand.vmem [shape: f32[128,128], index: 3, kind: input, shape index: {}]
  %s4 = inlined_call_operand.vmem [shape: f32[1,128], index: 4, kind: input, shape index: {}]
  %s5 = inlined_call_operand.hbm [shape: f32[128,128], index: 5, kind: input, shape index: {}]
  %s6 = inlined_call_operand.vmem [shape: f32[1,128], index: 6, kind: input, shape index: {}]
  %s7 = inlined_call_operand.vmem [shape: f32[128,32], index: 7, kind: input, shape index: {}]
  %s8 = inlined_call_operand.vmem [shape: f32[1,32], index: 8, kind: input, shape index: {}]
  %s9 = inlined_call_operand.hbm [shape: f32[8,32], index: 9, kind: output, shape index: {}]
  %s10 = sld [smem:[#allocation0]]
  $region54: #{_forward_impl.1} parent=0
    _
  %s12 = ssub.s32 1, %s10
  %s13 = scalar_select 0, %s12, %s10
  $region1: #{_forward_impl.1} parent=0
    #allocation2 [shape = 'u8[4096]{0}', space=vmem, size = 0x1000, scoped, tag = 'input window, operand 0, single buffered']
    #allocation3 [shape = 's32[1]{0}', space=sflag, size = 0x4, scoped, tag = 'scoped memory for _forward_impl.1']
    #allocation4 [shape = 's32[1]{0}', space=sflag, size = 0x4, scoped, tag = 'scoped memory for _forward_impl.1']
    #allocation5 [shape = 'u8[65536]{0}', space=vmem, size = 0x10000, scoped, tag = 'input window, operand 5, single buffered']
    #allocation6 [shape = 's32[1]{0}', space=sflag, size = 0x4, scoped, tag = 'scoped memory for _forward_impl.1']
    #allocation7 [shape = 'u8[4096]{0}', space=vmem, size = 0x1000, scoped, tag = 'output window, operand 0, single buffered']
    %14 = vsyncpa [#allocation3], 0
    %15 = vsyncpa [#allocation6], 0
    %16 = vsyncpa [#allocation4], 0
    // Predicated region
    $region2: #{_forward_impl.1} parent=1 // pred_check
      _
    $region3: #{_forward_impl.1} parent=1 // pred_check_branch
      %18 = sbr.rel (0) target = $region5
    $region4: #{_forward_impl.1} parent=1 // pred_region
      %20 = vsyncadd [#allocation3], 0
      %s22 = sshll.u32 %s0, 4
      %s23 = int_to_ptr.hbm [resolvable:$true] %s22
      %s24 = sshll.u32 [#allocation2], 4
      %s25 = int_to_ptr.vmem [resolvable:$true] %s24
      %27 = dma.hbm_to_vmem [thread:$0]  %s23, 128, %s25, [#allocation3]
    $region5: #{_forward_impl.1} parent=1 // pred_fallthru
      _
    // Predicated region
    $region6: #{_forward_impl.1} parent=1 // pred_check
      _
    $region7: #{_forward_impl.1} parent=1 // pred_check_branch
      %29 = sbr.rel (0) target = $region9
    $region8: #{_forward_impl.1} parent=1 // pred_region
      _
    $region9: #{_forward_impl.1} parent=1 // pred_fallthru
      _
    // Predicated region
    $region10: #{_forward_impl.1} parent=1 // pred_check
      _
    $region11: #{_forward_impl.1} parent=1 // pred_check_branch
      %31 = sbr.rel (0) target = $region13
    $region12: #{_forward_impl.1} parent=1 // pred_region
      _
    $region13: #{_forward_impl.1} parent=1 // pred_fallthru
      _
    // Predicated region
    $region14: #{_forward_impl.1} parent=1 // pred_check
      _
    $region15: #{_forward_impl.1} parent=1 // pred_check_branch
      %33 = sbr.rel (0) target = $region17
    $region16: #{_forward_impl.1} parent=1 // pred_region
      _
    $region17: #{_forward_impl.1} parent=1 // pred_fallthru
      _
    // Predicated region
    $region18: #{_forward_impl.1} parent=1 // pred_check
      _
    $region19: #{_forward_impl.1} parent=1 // pred_check_branch
      %35 = sbr.rel (0) target = $region21
    $region20: #{_forward_impl.1} parent=1 // pred_region
      _
    $region21: #{_forward_impl.1} parent=1 // pred_fallthru
      _
    // Predicated region
    $region22: #{_forward_impl.1} parent=1 // pred_check
      _
    $region23: #{_forward_impl.1} parent=1 // pred_check_branch
      %37 = sbr.rel (0) target = $region25
    $region24: #{_forward_impl.1} parent=1 // pred_region
      %39 = vsyncadd [#allocation6], 0
      %s40 = sshll.u32 %s5, 4
      %s41 = int_to_ptr.hbm [resolvable:$true] %s40
      %s42 = sshll.u32 [#allocation5], 4
      %s43 = int_to_ptr.vmem [resolvable:$true] %s42
      %48 = dma.hbm_to_vmem [thread:$0]  %s41, 2048, %s43, [#allocation6], 128, 128, 8
    $region25: #{_forward_impl.1} parent=1 // pred_fallthru
      _
    // Predicated region
    $region26: #{_forward_impl.1} parent=1 // pred_check
      _
    $region27: #{_forward_impl.1} parent=1 // pred_check_branch
      %50 = sbr.rel (0) target = $region29
    $region28: #{_forward_impl.1} parent=1 // pred_region
      _
    $region29: #{_forward_impl.1} parent=1 // pred_fallthru
      _
    // Predicated region
    $region30: #{_forward_impl.1} parent=1 // pred_check
      _
    $region31: #{_forward_impl.1} parent=1 // pred_check_branch
      %52 = sbr.rel (0) target = $region33
    $region32: #{_forward_impl.1} parent=1 // pred_region
      _
    $region33: #{_forward_impl.1} parent=1 // pred_fallthru
      _
    // Predicated region
    $region34: #{_forward_impl.1} parent=1 // pred_check
      _
    $region35: #{_forward_impl.1} parent=1 // pred_check_branch
      %54 = sbr.rel (0) target = $region37
    $region36: #{_forward_impl.1} parent=1 // pred_region
      _
    $region37: #{_forward_impl.1} parent=1 // pred_fallthru
      _
    // Predicated region
    $region38: #{_forward_impl.1} parent=1 // pred_check
      _
    $region39: #{_forward_impl.1} parent=1 // pred_check_branch
      %56 = sbr.rel (0) target = $region41
    $region40: #{_forward_impl.1} parent=1 // pred_region
      %58 = dma.done [#allocation3], 128
    $region41: #{_forward_impl.1} parent=1 // pred_fallthru
      _
    // Predicated region
    $region42: #{_forward_impl.1} parent=1 // pred_check
      _
    $region43: #{_forward_impl.1} parent=1 // pred_check_branch
      %60 = sbr.rel (0) target = $region45
    $region44: #{_forward_impl.1} parent=1 // pred_region
      %62 = dma.done [#allocation6], 2048
    $region45: #{_forward_impl.1} parent=1 // pred_fallthru
      _
    %v63 = vld [vmem:[#allocation2] sm:$0xff]
    %v64 = vld [vmem:[%s1] sm:$0xff]
    %v65 = vld [vmem:[%s1 + $0x8] sm:$0xff]
    %v66 = vld [vmem:[%s1 + $0x10] sm:$0xff]
    %v67 = vld [vmem:[%s1 + $0x18] sm:$0xff]
    %v68 = vld [vmem:[%s2] sm:$0x1]
    %v70 = vperm.slane %v68, 0
    %vm72 = vcmask 261120
    %v74 = vsel %vm72, %v63, 0
    %76 = vmatpush.msra.mxu0 0.0
    %77 = vmatpush.msra.mxu0 0.0
    %78 = vmatpush.msra.mxu0 0.0
    %79 = vmatpush.msra.mxu0 0.0
    %80 = vmatpush.msra.mxu0 0.0
    %81 = vmatpush.msra.mxu0 0.0
    %82 = vmatpush.msra.mxu0 0.0
    %83 = vmatpush.msra.mxu0 0.0
    %84 = vmatpush.msra.mxu0 0.0
    %85 = vmatpush.msra.mxu0 0.0
    %86 = vmatpush.msra.mxu0 0.0
    %87 = vmatpush.msra.mxu0 0.0
    %v88 = vand.u32 %v67, 4294901760
    %89 = vmatpush.msra.mxu0 %v88
    %v90 = vand.u32 %v66, 4294901760
    %91 = vmatpush.msra.mxu0 %v90
    %v92 = vand.u32 %v65, 4294901760
    %93 = vmatpush.msra.mxu0 %v92
    %v94 = vand.u32 %v64, 4294901760
    %95 = vmatpush.msra.mxu0 %v94
    %v96 = vand.u32 %v74, 4294901760
    %v97 = vsub.f32 %v74, %v96
    %v98 = vand.u32 %v97, 4294901760
    %v99 = vsub.f32 %v97, %v98
    %v100 = vand.u32 %v99, 4294901760
    %101 = vmatmul.f32.gmra.mxu0 %v100
    %v102 = vpop.f32.mrf.mxu0
    %v103 = vadd.f32 %v70, %v102
    %104 = vdwg.mxu0
    %105 = vmatpush.msra.mxu0 0.0
    %106 = vmatpush.msra.mxu0 0.0
    %107 = vmatpush.msra.mxu0 0.0
    %108 = vmatpush.msra.mxu0 0.0
    %109 = vmatpush.msra.mxu0 0.0
    %110 = vmatpush.msra.mxu0 0.0
    %111 = vmatpush.msra.mxu0 0.0
    %112 = vmatpush.msra.mxu0 0.0
    %113 = vmatpush.msra.mxu0 0.0
    %114 = vmatpush.msra.mxu0 0.0
    %115 = vmatpush.msra.mxu0 0.0
    %116 = vmatpush.msra.mxu0 0.0
    %v117 = vand.u32 %v67, 4294901760
    %v118 = vsub.f32 %v67, %v117
    %v119 = vand.u32 %v118, 4294901760
    %v120 = vsub.f32 %v118, %v119
    %v121 = vand.u32 %v120, 4294901760
    %122 = vmatpush.msra.mxu0 %v121
    %v123 = vand.u32 %v66, 4294901760
    %v124 = vsub.f32 %v66, %v123
    %v125 = vand.u32 %v124, 4294901760
    %v126 = vsub.f32 %v124, %v125
    %v127 = vand.u32 %v126, 4294901760
    %128 = vmatpush.msra.mxu0 %v127
    %v129 = vand.u32 %v65, 4294901760
    %v130 = vsub.f32 %v65, %v129
    %v131 = vand.u32 %v130, 4294901760
    %v132 = vsub.f32 %v130, %v131
    %v133 = vand.u32 %v132, 4294901760
    %134 = vmatpush.msra.mxu0 %v133
    %v135 = vand.u32 %v64, 4294901760
    %v136 = vsub.f32 %v64, %v135
    %v137 = vand.u32 %v136, 4294901760
    %v138 = vsub.f32 %v136, %v137
    %v139 = vand.u32 %v138, 4294901760
    %140 = vmatpush.msra.mxu0 %v139
    %v141 = vand.u32 %v74, 4294901760
    %142 = vmatmul.f32.gmra.mxu0 %v141
    %v143 = vpop.f32.mrf.mxu0
    %v144 = vadd.f32 %v103, %v143
    %145 = vdwg.mxu0
    %146 = vmatpush.msra.mxu0 0.0
    %147 = vmatpush.msra.mxu0 0.0
    %148 = vmatpush.msra.mxu0 0.0
    %149 = vmatpush.msra.mxu0 0.0
    %150 = vmatpush.msra.mxu0 0.0
    %151 = vmatpush.msra.mxu0 0.0
    %152 = vmatpush.msra.mxu0 0.0
    %153 = vmatpush.msra.mxu0 0.0
    %154 = vmatpush.msra.mxu0 0.0
    %155 = vmatpush.msra.mxu0 0.0
    %156 = vmatpush.msra.mxu0 0.0
    %157 = vmatpush.msra.mxu0 0.0
    %v158 = vand.u32 %v67, 4294901760
    %v159 = vsub.f32 %v67, %v158
    %160 = vmatpush.msra.mxu0 %v159
    %v161 = vand.u32 %v66, 4294901760
    %v162 = vsub.f32 %v66, %v161
    %163 = vmatpush.msra.mxu0 %v162
    %v164 = vand.u32 %v65, 4294901760
    %v165 = vsub.f32 %v65, %v164
    %166 = vmatpush.msra.mxu0 %v165
    %v167 = vand.u32 %v64, 4294901760
    %v168 = vsub.f32 %v64, %v167
    %169 = vmatpush.msra.mxu0 %v168
    %v170 = vand.u32 %v74, 4294901760
    %v171 = vsub.f32 %v74, %v170
    %172 = vmatmul.f32.gmra.mxu0 %v171
    %v173 = vpop.f32.mrf.mxu0
    %v174 = vadd.f32 %v144, %v173
    %175 = vdwg.mxu0
    %176 = vmatpush.msra.mxu0 0.0
    %177 = vmatpush.msra.mxu0 0.0
    %178 = vmatpush.msra.mxu0 0.0
    %179 = vmatpush.msra.mxu0 0.0
    %180 = vmatpush.msra.mxu0 0.0
    %181 = vmatpush.msra.mxu0 0.0
    %182 = vmatpush.msra.mxu0 0.0
    %183 = vmatpush.msra.mxu0 0.0
    %184 = vmatpush.msra.mxu0 0.0
    %185 = vmatpush.msra.mxu0 0.0
    %186 = vmatpush.msra.mxu0 0.0
    %187 = vmatpush.msra.mxu0 0.0
    %v188 = vand.u32 %v67, 4294901760
    %189 = vmatpush.msra.mxu0 %v188
    %v190 = vand.u32 %v66, 4294901760
    %191 = vmatpush.msra.mxu0 %v190
    %v192 = vand.u32 %v65, 4294901760
    %193 = vmatpush.msra.mxu0 %v192
    %v194 = vand.u32 %v64, 4294901760
    %195 = vmatpush.msra.mxu0 %v194
    %v196 = vand.u32 %v74, 4294901760
    %v197 = vsub.f32 %v74, %v196
    %v198 = vand.u32 %v197, 4294901760
    %199 = vmatmul.f32.gmra.mxu0 %v198
    %v200 = vpop.f32.mrf.mxu0
    %v201 = vadd.f32 %v174, %v200
    %202 = vdwg.mxu0
    %203 = vmatpush.msra.mxu0 0.0
    %204 = vmatpush.msra.mxu0 0.0
    %205 = vmatpush.msra.mxu0 0.0
    %206 = vmatpush.msra.mxu0 0.0
    %207 = vmatpush.msra.mxu0 0.0
    %208 = vmatpush.msra.mxu0 0.0
    %209 = vmatpush.msra.mxu0 0.0
    %210 = vmatpush.msra.mxu0 0.0
    %211 = vmatpush.msra.mxu0 0.0
    %212 = vmatpush.msra.mxu0 0.0
    %213 = vmatpush.msra.mxu0 0.0
    %214 = vmatpush.msra.mxu0 0.0
    %v215 = vand.u32 %v67, 4294901760
    %v216 = vsub.f32 %v67, %v215
    %v217 = vand.u32 %v216, 4294901760
    %218 = vmatpush.msra.mxu0 %v217
    %v219 = vand.u32 %v66, 4294901760
    %v220 = vsub.f32 %v66, %v219
    %v221 = vand.u32 %v220, 4294901760
    %222 = vmatpush.msra.mxu0 %v221
    %v223 = vand.u32 %v65, 4294901760
    %v224 = vsub.f32 %v65, %v223
    %v225 = vand.u32 %v224, 4294901760
    %226 = vmatpush.msra.mxu0 %v225
    %v227 = vand.u32 %v64, 4294901760
    %v228 = vsub.f32 %v64, %v227
    %v229 = vand.u32 %v228, 4294901760
    %230 = vmatpush.msra.mxu0 %v229
    %v231 = vand.u32 %v74, 4294901760
    %232 = vmatmul.f32.gmra.mxu0 %v231
    %v233 = vpop.f32.mrf.mxu0
    %v234 = vadd.f32 %v201, %v233
    %235 = vdwg.mxu0
    %236 = vmatpush.msra.mxu0 0.0
    %237 = vmatpush.msra.mxu0 0.0
    %238 = vmatpush.msra.mxu0 0.0
    %239 = vmatpush.msra.mxu0 0.0
    %240 = vmatpush.msra.mxu0 0.0
    %241 = vmatpush.msra.mxu0 0.0
    %242 = vmatpush.msra.mxu0 0.0
    %243 = vmatpush.msra.mxu0 0.0
    %244 = vmatpush.msra.mxu0 0.0
    %245 = vmatpush.msra.mxu0 0.0
    %246 = vmatpush.msra.mxu0 0.0
    %247 = vmatpush.msra.mxu0 0.0
    %v248 = vand.u32 %v67, 4294901760
    %249 = vmatpush.msra.mxu0 %v248
    %v250 = vand.u32 %v66, 4294901760
    %251 = vmatpush.msra.mxu0 %v250
    %v252 = vand.u32 %v65, 4294901760
    %253 = vmatpush.msra.mxu0 %v252
    %v254 = vand.u32 %v64, 4294901760
    %255 = vmatpush.msra.mxu0 %v254
    %v256 = vand.u32 %v74, 4294901760
    %257 = vmatmul.f32.gmra.mxu0 %v256
    %v258 = vpop.f32.mrf.mxu0
    %v259 = vadd.f32 %v234, %v258
    %260 = vdwg.mxu0
    %v261 = vmax.f32 %v259, 0.0
    %v262 = vld [vmem:[%s3] sm:$0xff]
    %v263 = vld [vmem:[%s3 + $0x8] sm:$0xff]
    %v264 = vld [vmem:[%s3 + $0x10] sm:$0xff]
    %v265 = vld [vmem:[%s3 + $0x18] sm:$0xff]
    %v266 = vld [vmem:[%s3 + $0x20] sm:$0xff]
    %v267 = vld [vmem:[%s3 + $0x28] sm:$0xff]
    %v268 = vld [vmem:[%s3 + $0x30] sm:$0xff]
    %v269 = vld [vmem:[%s3 + $0x38] sm:$0xff]
    %v270 = vld [vmem:[%s3 + $0x40] sm:$0xff]
    %v271 = vld [vmem:[%s3 + $0x48] sm:$0xff]
    %v272 = vld [vmem:[%s3 + $0x50] sm:$0xff]
    %v273 = vld [vmem:[%s3 + $0x58] sm:$0xff]
    %v274 = vld [vmem:[%s3 + $0x60] sm:$0xff]
    %v275 = vld [vmem:[%s3 + $0x68] sm:$0xff]
    %v276 = vld [vmem:[%s3 + $0x70] sm:$0xff]
    %v277 = vld [vmem:[%s3 + $0x78] sm:$0xff]
    %v278 = vld [vmem:[%s4] sm:$0x1]
    %v280 = vperm.slane %v278, 0
    %v282 = vand.u32 %v277, 4294901760
    %283 = vmatpush.msra.mxu0 %v282
    %v284 = vand.u32 %v276, 4294901760
    %285 = vmatpush.msra.mxu0 %v284
    %v286 = vand.u32 %v275, 4294901760
    %287 = vmatpush.msra.mxu0 %v286
    %v288 = vand.u32 %v274, 4294901760
    %289 = vmatpush.msra.mxu0 %v288
    %v290 = vand.u32 %v273, 4294901760
    %291 = vmatpush.msra.mxu0 %v290
    %v292 = vand.u32 %v272, 4294901760
    %293 = vmatpush.msra.mxu0 %v292
    %v294 = vand.u32 %v271, 4294901760
    %295 = vmatpush.msra.mxu0 %v294
    %v296 = vand.u32 %v270, 4294901760
    %297 = vmatpush.msra.mxu0 %v296
    %v298 = vand.u32 %v269, 4294901760
    %299 = vmatpush.msra.mxu0 %v298
    %v300 = vand.u32 %v268, 4294901760
    %301 = vmatpush.msra.mxu0 %v300
    %v302 = vand.u32 %v267, 4294901760
    %303 = vmatpush.msra.mxu0 %v302
    %v304 = vand.u32 %v266, 4294901760
    %305 = vmatpush.msra.mxu0 %v304
    %v306 = vand.u32 %v265, 4294901760
    %307 = vmatpush.msra.mxu0 %v306
    %v308 = vand.u32 %v264, 4294901760
    %309 = vmatpush.msra.mxu0 %v308
    %v310 = vand.u32 %v263, 4294901760
    %311 = vmatpush.msra.mxu0 %v310
    %v312 = vand.u32 %v262, 4294901760
    %313 = vmatpush.msra.mxu0 %v312
    %v314 = vand.u32 %v261, 4294901760
    %v315 = vsub.f32 %v261, %v314
    %v316 = vand.u32 %v315, 4294901760
    %v317 = vsub.f32 %v315, %v316
    %v318 = vand.u32 %v317, 4294901760
    %319 = vmatmul.f32.gmra.mxu0 %v318
    %v320 = vpop.f32.mrf.mxu0
    %v321 = vadd.f32 %v280, %v320
    %322 = vdwg.mxu0
    %v323 = vand.u32 %v277, 4294901760
    %v324 = vsub.f32 %v277, %v323
    %v325 = vand.u32 %v324, 4294901760
    %v326 = vsub.f32 %v324, %v325
    %v327 = vand.u32 %v326, 4294901760
    %328 = vmatpush.msra.mxu0 %v327
    %v329 = vand.u32 %v276, 4294901760
    %v330 = vsub.f32 %v276, %v329
    %v331 = vand.u32 %v330, 4294901760
    %v332 = vsub.f32 %v330, %v331
    %v333 = vand.u32 %v332, 4294901760
    %334 = vmatpush.msra.mxu0 %v333
    %v335 = vand.u32 %v275, 4294901760
    %v336 = vsub.f32 %v275, %v335
    %v337 = vand.u32 %v336, 4294901760
    %v338 = vsub.f32 %v336, %v337
    %v339 = vand.u32 %v338, 4294901760
    %340 = vmatpush.msra.mxu0 %v339
    %v341 = vand.u32 %v274, 4294901760
    %v342 = vsub.f32 %v274, %v341
    %v343 = vand.u32 %v342, 4294901760
    %v344 = vsub.f32 %v342, %v343
    %v345 = vand.u32 %v344, 4294901760
    %346 = vmatpush.msra.mxu0 %v345
    %v347 = vand.u32 %v273, 4294901760
    %v348 = vsub.f32 %v273, %v347
    %v349 = vand.u32 %v348, 4294901760
    %v350 = vsub.f32 %v348, %v349
    %v351 = vand.u32 %v350, 4294901760
    %352 = vmatpush.msra.mxu0 %v351
    %v353 = vand.u32 %v272, 4294901760
    %v354 = vsub.f32 %v272, %v353
    %v355 = vand.u32 %v354, 4294901760
    %v356 = vsub.f32 %v354, %v355
    %v357 = vand.u32 %v356, 4294901760
    %358 = vmatpush.msra.mxu0 %v357
    %v359 = vand.u32 %v271, 4294901760
    %v360 = vsub.f32 %v271, %v359
    %v361 = vand.u32 %v360, 4294901760
    %v362 = vsub.f32 %v360, %v361
    %v363 = vand.u32 %v362, 4294901760
    %364 = vmatpush.msra.mxu0 %v363
    %v365 = vand.u32 %v270, 4294901760
    %v366 = vsub.f32 %v270, %v365
    %v367 = vand.u32 %v366, 4294901760
    %v368 = vsub.f32 %v366, %v367
    %v369 = vand.u32 %v368, 4294901760
    %370 = vmatpush.msra.mxu0 %v369
    %v371 = vand.u32 %v269, 4294901760
    %v372 = vsub.f32 %v269, %v371
    %v373 = vand.u32 %v372, 4294901760
    %v374 = vsub.f32 %v372, %v373
    %v375 = vand.u32 %v374, 4294901760
    %376 = vmatpush.msra.mxu0 %v375
    %v377 = vand.u32 %v268, 4294901760
    %v378 = vsub.f32 %v268, %v377
    %v379 = vand.u32 %v378, 4294901760
    %v380 = vsub.f32 %v378, %v379
    %v381 = vand.u32 %v380, 4294901760
    %382 = vmatpush.msra.mxu0 %v381
    %v383 = vand.u32 %v267, 4294901760
    %v384 = vsub.f32 %v267, %v383
    %v385 = vand.u32 %v384, 4294901760
    %v386 = vsub.f32 %v384, %v385
    %v387 = vand.u32 %v386, 4294901760
    %388 = vmatpush.msra.mxu0 %v387
    %v389 = vand.u32 %v266, 4294901760
    %v390 = vsub.f32 %v266, %v389
    %v391 = vand.u32 %v390, 4294901760
    %v392 = vsub.f32 %v390, %v391
    %v393 = vand.u32 %v392, 4294901760
    %394 = vmatpush.msra.mxu0 %v393
    %v395 = vand.u32 %v265, 4294901760
    %v396 = vsub.f32 %v265, %v395
    %v397 = vand.u32 %v396, 4294901760
    %v398 = vsub.f32 %v396, %v397
    %v399 = vand.u32 %v398, 4294901760
    %400 = vmatpush.msra.mxu0 %v399
    %v401 = vand.u32 %v264, 4294901760
    %v402 = vsub.f32 %v264, %v401
    %v403 = vand.u32 %v402, 4294901760
    %v404 = vsub.f32 %v402, %v403
    %v405 = vand.u32 %v404, 4294901760
    %406 = vmatpush.msra.mxu0 %v405
    %v407 = vand.u32 %v263, 4294901760
    %v408 = vsub.f32 %v263, %v407
    %v409 = vand.u32 %v408, 4294901760
    %v410 = vsub.f32 %v408, %v409
    %v411 = vand.u32 %v410, 4294901760
    %412 = vmatpush.msra.mxu0 %v411
    %v413 = vand.u32 %v262, 4294901760
    %v414 = vsub.f32 %v262, %v413
    %v415 = vand.u32 %v414, 4294901760
    %v416 = vsub.f32 %v414, %v415
    %v417 = vand.u32 %v416, 4294901760
    %418 = vmatpush.msra.mxu0 %v417
    %v419 = vand.u32 %v261, 4294901760
    %420 = vmatmul.f32.gmra.mxu0 %v419
    %v421 = vpop.f32.mrf.mxu0
    %v422 = vadd.f32 %v321, %v421
    %423 = vdwg.mxu0
    %v424 = vand.u32 %v277, 4294901760
    %v425 = vsub.f32 %v277, %v424
    %426 = vmatpush.msra.mxu0 %v425
    %v427 = vand.u32 %v276, 4294901760
    %v428 = vsub.f32 %v276, %v427
    %429 = vmatpush.msra.mxu0 %v428
    %v430 = vand.u32 %v275, 4294901760
    %v431 = vsub.f32 %v275, %v430
    %432 = vmatpush.msra.mxu0 %v431
    %v433 = vand.u32 %v274, 4294901760
    %v434 = vsub.f32 %v274, %v433
    %435 = vmatpush.msra.mxu0 %v434
    %v436 = vand.u32 %v273, 4294901760
    %v437 = vsub.f32 %v273, %v436
    %438 = vmatpush.msra.mxu0 %v437
    %v439 = vand.u32 %v272, 4294901760
    %v440 = vsub.f32 %v272, %v439
    %441 = vmatpush.msra.mxu0 %v440
    %v442 = vand.u32 %v271, 4294901760
    %v443 = vsub.f32 %v271, %v442
    %444 = vmatpush.msra.mxu0 %v443
    %v445 = vand.u32 %v270, 4294901760
    %v446 = vsub.f32 %v270, %v445
    %447 = vmatpush.msra.mxu0 %v446
    %v448 = vand.u32 %v269, 4294901760
    %v449 = vsub.f32 %v269, %v448
    %450 = vmatpush.msra.mxu0 %v449
    %v451 = vand.u32 %v268, 4294901760
    %v452 = vsub.f32 %v268, %v451
    %453 = vmatpush.msra.mxu0 %v452
    %v454 = vand.u32 %v267, 4294901760
    %v455 = vsub.f32 %v267, %v454
    %456 = vmatpush.msra.mxu0 %v455
    %v457 = vand.u32 %v266, 4294901760
    %v458 = vsub.f32 %v266, %v457
    %459 = vmatpush.msra.mxu0 %v458
    %v460 = vand.u32 %v265, 4294901760
    %v461 = vsub.f32 %v265, %v460
    %462 = vmatpush.msra.mxu0 %v461
    %v463 = vand.u32 %v264, 4294901760
    %v464 = vsub.f32 %v264, %v463
    %465 = vmatpush.msra.mxu0 %v464
    %v466 = vand.u32 %v263, 4294901760
    %v467 = vsub.f32 %v263, %v466
    %468 = vmatpush.msra.mxu0 %v467
    %v469 = vand.u32 %v262, 4294901760
    %v470 = vsub.f32 %v262, %v469
    %471 = vmatpush.msra.mxu0 %v470
    %v472 = vand.u32 %v261, 4294901760
    %v473 = vsub.f32 %v261, %v472
    %474 = vmatmul.f32.gmra.mxu0 %v473
    %v475 = vpop.f32.mrf.mxu0
    %v476 = vadd.f32 %v422, %v475
    %477 = vdwg.mxu0
    %v478 = vand.u32 %v277, 4294901760
    %479 = vmatpush.msra.mxu0 %v478
    %v480 = vand.u32 %v276, 4294901760
    %481 = vmatpush.msra.mxu0 %v480
    %v482 = vand.u32 %v275, 4294901760
    %483 = vmatpush.msra.mxu0 %v482
    %v484 = vand.u32 %v274, 4294901760
    %485 = vmatpush.msra.mxu0 %v484
    %v486 = vand.u32 %v273, 4294901760
    %487 = vmatpush.msra.mxu0 %v486
    %v488 = vand.u32 %v272, 4294901760
    %489 = vmatpush.msra.mxu0 %v488
    %v490 = vand.u32 %v271, 4294901760
    %491 = vmatpush.msra.mxu0 %v490
    %v492 = vand.u32 %v270, 4294901760
    %493 = vmatpush.msra.mxu0 %v492
    %v494 = vand.u32 %v269, 4294901760
    %495 = vmatpush.msra.mxu0 %v494
    %v496 = vand.u32 %v268, 4294901760
    %497 = vmatpush.msra.mxu0 %v496
    %v498 = vand.u32 %v267, 4294901760
    %499 = vmatpush.msra.mxu0 %v498
    %v500 = vand.u32 %v266, 4294901760
    %501 = vmatpush.msra.mxu0 %v500
    %v502 = vand.u32 %v265, 4294901760
    %503 = vmatpush.msra.mxu0 %v502
    %v504 = vand.u32 %v264, 4294901760
    %505 = vmatpush.msra.mxu0 %v504
    %v506 = vand.u32 %v263, 4294901760
    %507 = vmatpush.msra.mxu0 %v506
    %v508 = vand.u32 %v262, 4294901760
    %509 = vmatpush.msra.mxu0 %v508
    %v510 = vand.u32 %v261, 4294901760
    %v511 = vsub.f32 %v261, %v510
    %v512 = vand.u32 %v511, 4294901760
    %513 = vmatmul.f32.gmra.mxu0 %v512
    %v514 = vpop.f32.mrf.mxu0
    %v515 = vadd.f32 %v476, %v514
    %516 = vdwg.mxu0
    %v517 = vand.u32 %v277, 4294901760
    %v518 = vsub.f32 %v277, %v517
    %v519 = vand.u32 %v518, 4294901760
    %520 = vmatpush.msra.mxu0 %v519
    %v521 = vand.u32 %v276, 4294901760
    %v522 = vsub.f32 %v276, %v521
    %v523 = vand.u32 %v522, 4294901760
    %524 = vmatpush.msra.mxu0 %v523
    %v525 = vand.u32 %v275, 4294901760
    %v526 = vsub.f32 %v275, %v525
    %v527 = vand.u32 %v526, 4294901760
    %528 = vmatpush.msra.mxu0 %v527
    %v529 = vand.u32 %v274, 4294901760
    %v530 = vsub.f32 %v274, %v529
    %v531 = vand.u32 %v530, 4294901760
    %532 = vmatpush.msra.mxu0 %v531
    %v533 = vand.u32 %v273, 4294901760
    %v534 = vsub.f32 %v273, %v533
    %v535 = vand.u32 %v534, 4294901760
    %536 = vmatpush.msra.mxu0 %v535
    %v537 = vand.u32 %v272, 4294901760
    %v538 = vsub.f32 %v272, %v537
    %v539 = vand.u32 %v538, 4294901760
    %540 = vmatpush.msra.mxu0 %v539
    %v541 = vand.u32 %v271, 4294901760
    %v542 = vsub.f32 %v271, %v541
    %v543 = vand.u32 %v542, 4294901760
    %544 = vmatpush.msra.mxu0 %v543
    %v545 = vand.u32 %v270, 4294901760
    %v546 = vsub.f32 %v270, %v545
    %v547 = vand.u32 %v546, 4294901760
    %548 = vmatpush.msra.mxu0 %v547
    %v549 = vand.u32 %v269, 4294901760
    %v550 = vsub.f32 %v269, %v549
    %v551 = vand.u32 %v550, 4294901760
    %552 = vmatpush.msra.mxu0 %v551
    %v553 = vand.u32 %v268, 4294901760
    %v554 = vsub.f32 %v268, %v553
    %v555 = vand.u32 %v554, 4294901760
    %556 = vmatpush.msra.mxu0 %v555
    %v557 = vand.u32 %v267, 4294901760
    %v558 = vsub.f32 %v267, %v557
    %v559 = vand.u32 %v558, 4294901760
    %560 = vmatpush.msra.mxu0 %v559
    %v561 = vand.u32 %v266, 4294901760
    %v562 = vsub.f32 %v266, %v561
    %v563 = vand.u32 %v562, 4294901760
    %564 = vmatpush.msra.mxu0 %v563
    %v565 = vand.u32 %v265, 4294901760
    %v566 = vsub.f32 %v265, %v565
    %v567 = vand.u32 %v566, 4294901760
    %568 = vmatpush.msra.mxu0 %v567
    %v569 = vand.u32 %v264, 4294901760
    %v570 = vsub.f32 %v264, %v569
    %v571 = vand.u32 %v570, 4294901760
    %572 = vmatpush.msra.mxu0 %v571
    %v573 = vand.u32 %v263, 4294901760
    %v574 = vsub.f32 %v263, %v573
    %v575 = vand.u32 %v574, 4294901760
    %576 = vmatpush.msra.mxu0 %v575
    %v577 = vand.u32 %v262, 4294901760
    %v578 = vsub.f32 %v262, %v577
    %v579 = vand.u32 %v578, 4294901760
    %580 = vmatpush.msra.mxu0 %v579
    %v581 = vand.u32 %v261, 4294901760
    %582 = vmatmul.f32.gmra.mxu0 %v581
    %v583 = vpop.f32.mrf.mxu0
    %v584 = vadd.f32 %v515, %v583
    %585 = vdwg.mxu0
    %v586 = vand.u32 %v277, 4294901760
    %587 = vmatpush.msra.mxu0 %v586
    %v588 = vand.u32 %v276, 4294901760
    %589 = vmatpush.msra.mxu0 %v588
    %v590 = vand.u32 %v275, 4294901760
    %591 = vmatpush.msra.mxu0 %v590
    %v592 = vand.u32 %v274, 4294901760
    %593 = vmatpush.msra.mxu0 %v592
    %v594 = vand.u32 %v273, 4294901760
    %595 = vmatpush.msra.mxu0 %v594
    %v596 = vand.u32 %v272, 4294901760
    %597 = vmatpush.msra.mxu0 %v596
    %v598 = vand.u32 %v271, 4294901760
    %599 = vmatpush.msra.mxu0 %v598
    %v600 = vand.u32 %v270, 4294901760
    %601 = vmatpush.msra.mxu0 %v600
    %v602 = vand.u32 %v269, 4294901760
    %603 = vmatpush.msra.mxu0 %v602
    %v604 = vand.u32 %v268, 4294901760
    %605 = vmatpush.msra.mxu0 %v604
    %v606 = vand.u32 %v267, 4294901760
    %607 = vmatpush.msra.mxu0 %v606
    %v608 = vand.u32 %v266, 4294901760
    %609 = vmatpush.msra.mxu0 %v608
    %v610 = vand.u32 %v265, 4294901760
    %611 = vmatpush.msra.mxu0 %v610
    %v612 = vand.u32 %v264, 4294901760
    %613 = vmatpush.msra.mxu0 %v612
    %v614 = vand.u32 %v263, 4294901760
    %615 = vmatpush.msra.mxu0 %v614
    %v616 = vand.u32 %v262, 4294901760
    %617 = vmatpush.msra.mxu0 %v616
    %v618 = vand.u32 %v261, 4294901760
    %619 = vmatmul.f32.gmra.mxu0 %v618
    %v620 = vpop.f32.mrf.mxu0
    %v621 = vadd.f32 %v584, %v620
    %622 = vdwg.mxu0
    %v623 = vmax.f32 %v621, 0.0
    %v624 = vld [vmem:[#allocation5] sm:$0xff]
    %v625 = vld [vmem:[#allocation5 + $0x8] sm:$0xff]
    %v626 = vld [vmem:[#allocation5 + $0x10] sm:$0xff]
    %v627 = vld [vmem:[#allocation5 + $0x18] sm:$0xff]
    %v628 = vld [vmem:[#allocation5 + $0x20] sm:$0xff]
    %v629 = vld [vmem:[#allocation5 + $0x28] sm:$0xff]
    %v630 = vld [vmem:[#allocation5 + $0x30] sm:$0xff]
    %v631 = vld [vmem:[#allocation5 + $0x38] sm:$0xff]
    %v632 = vld [vmem:[#allocation5 + $0x40] sm:$0xff]
    %v633 = vld [vmem:[#allocation5 + $0x48] sm:$0xff]
    %v634 = vld [vmem:[#allocation5 + $0x50] sm:$0xff]
    %v635 = vld [vmem:[#allocation5 + $0x58] sm:$0xff]
    %v636 = vld [vmem:[#allocation5 + $0x60] sm:$0xff]
    %v637 = vld [vmem:[#allocation5 + $0x68] sm:$0xff]
    %v638 = vld [vmem:[#allocation5 + $0x70] sm:$0xff]
    %v639 = vld [vmem:[#allocation5 + $0x78] sm:$0xff]
    %v640 = vld [vmem:[%s6] sm:$0x1]
    %v642 = vperm.slane %v640, 0
    %v644 = vand.u32 %v639, 4294901760
    %645 = vmatpush.msra.mxu0 %v644
    %v646 = vand.u32 %v638, 4294901760
    %647 = vmatpush.msra.mxu0 %v646
    %v648 = vand.u32 %v637, 4294901760
    %649 = vmatpush.msra.mxu0 %v648
    %v650 = vand.u32 %v636, 4294901760
    %651 = vmatpush.msra.mxu0 %v650
    %v652 = vand.u32 %v635, 4294901760
    %653 = vmatpush.msra.mxu0 %v652
    %v654 = vand.u32 %v634, 4294901760
    %655 = vmatpush.msra.mxu0 %v654
    %v656 = vand.u32 %v633, 4294901760
    %657 = vmatpush.msra.mxu0 %v656
    %v658 = vand.u32 %v632, 4294901760
    %659 = vmatpush.msra.mxu0 %v658
    %v660 = vand.u32 %v631, 4294901760
    %661 = vmatpush.msra.mxu0 %v660
    %v662 = vand.u32 %v630, 4294901760
    %663 = vmatpush.msra.mxu0 %v662
    %v664 = vand.u32 %v629, 4294901760
    %665 = vmatpush.msra.mxu0 %v664
    %v666 = vand.u32 %v628, 4294901760
    %667 = vmatpush.msra.mxu0 %v666
    %v668 = vand.u32 %v627, 4294901760
    %669 = vmatpush.msra.mxu0 %v668
    %v670 = vand.u32 %v626, 4294901760
    %671 = vmatpush.msra.mxu0 %v670
    %v672 = vand.u32 %v625, 4294901760
    %673 = vmatpush.msra.mxu0 %v672
    %v674 = vand.u32 %v624, 4294901760
    %675 = vmatpush.msra.mxu0 %v674
    %v676 = vand.u32 %v623, 4294901760
    %v677 = vsub.f32 %v623, %v676
    %v678 = vand.u32 %v677, 4294901760
    %v679 = vsub.f32 %v677, %v678
    %v680 = vand.u32 %v679, 4294901760
    %681 = vmatmul.f32.gmra.mxu0 %v680
    %v682 = vpop.f32.mrf.mxu0
    %v683 = vadd.f32 %v642, %v682
    %684 = vdwg.mxu0
    %v685 = vand.u32 %v639, 4294901760
    %v686 = vsub.f32 %v639, %v685
    %v687 = vand.u32 %v686, 4294901760
    %v688 = vsub.f32 %v686, %v687
    %v689 = vand.u32 %v688, 4294901760
    %690 = vmatpush.msra.mxu0 %v689
    %v691 = vand.u32 %v638, 4294901760
    %v692 = vsub.f32 %v638, %v691
    %v693 = vand.u32 %v692, 4294901760
    %v694 = vsub.f32 %v692, %v693
    %v695 = vand.u32 %v694, 4294901760
    %696 = vmatpush.msra.mxu0 %v695
    %v697 = vand.u32 %v637, 4294901760
    %v698 = vsub.f32 %v637, %v697
    %v699 = vand.u32 %v698, 4294901760
    %v700 = vsub.f32 %v698, %v699
    %v701 = vand.u32 %v700, 4294901760
    %702 = vmatpush.msra.mxu0 %v701
    %v703 = vand.u32 %v636, 4294901760
    %v704 = vsub.f32 %v636, %v703
    %v705 = vand.u32 %v704, 4294901760
    %v706 = vsub.f32 %v704, %v705
    %v707 = vand.u32 %v706, 4294901760
    %708 = vmatpush.msra.mxu0 %v707
    %v709 = vand.u32 %v635, 4294901760
    %v710 = vsub.f32 %v635, %v709
    %v711 = vand.u32 %v710, 4294901760
    %v712 = vsub.f32 %v710, %v711
    %v713 = vand.u32 %v712, 4294901760
    %714 = vmatpush.msra.mxu0 %v713
    %v715 = vand.u32 %v634, 4294901760
    %v716 = vsub.f32 %v634, %v715
    %v717 = vand.u32 %v716, 4294901760
    %v718 = vsub.f32 %v716, %v717
    %v719 = vand.u32 %v718, 4294901760
    %720 = vmatpush.msra.mxu0 %v719
    %v721 = vand.u32 %v633, 4294901760
    %v722 = vsub.f32 %v633, %v721
    %v723 = vand.u32 %v722, 4294901760
    %v724 = vsub.f32 %v722, %v723
    %v725 = vand.u32 %v724, 4294901760
    %726 = vmatpush.msra.mxu0 %v725
    %v727 = vand.u32 %v632, 4294901760
    %v728 = vsub.f32 %v632, %v727
    %v729 = vand.u32 %v728, 4294901760
    %v730 = vsub.f32 %v728, %v729
    %v731 = vand.u32 %v730, 4294901760
    %732 = vmatpush.msra.mxu0 %v731
    %v733 = vand.u32 %v631, 4294901760
    %v734 = vsub.f32 %v631, %v733
    %v735 = vand.u32 %v734, 4294901760
    %v736 = vsub.f32 %v734, %v735
    %v737 = vand.u32 %v736, 4294901760
    %738 = vmatpush.msra.mxu0 %v737
    %v739 = vand.u32 %v630, 4294901760
    %v740 = vsub.f32 %v630, %v739
    %v741 = vand.u32 %v740, 4294901760
    %v742 = vsub.f32 %v740, %v741
    %v743 = vand.u32 %v742, 4294901760
    %744 = vmatpush.msra.mxu0 %v743
    %v745 = vand.u32 %v629, 4294901760
    %v746 = vsub.f32 %v629, %v745
    %v747 = vand.u32 %v746, 4294901760
    %v748 = vsub.f32 %v746, %v747
    %v749 = vand.u32 %v748, 4294901760
    %750 = vmatpush.msra.mxu0 %v749
    %v751 = vand.u32 %v628, 4294901760
    %v752 = vsub.f32 %v628, %v751
    %v753 = vand.u32 %v752, 4294901760
    %v754 = vsub.f32 %v752, %v753
    %v755 = vand.u32 %v754, 4294901760
    %756 = vmatpush.msra.mxu0 %v755
    %v757 = vand.u32 %v627, 4294901760
    %v758 = vsub.f32 %v627, %v757
    %v759 = vand.u32 %v758, 4294901760
    %v760 = vsub.f32 %v758, %v759
    %v761 = vand.u32 %v760, 4294901760
    %762 = vmatpush.msra.mxu0 %v761
    %v763 = vand.u32 %v626, 4294901760
    %v764 = vsub.f32 %v626, %v763
    %v765 = vand.u32 %v764, 4294901760
    %v766 = vsub.f32 %v764, %v765
    %v767 = vand.u32 %v766, 4294901760
    %768 = vmatpush.msra.mxu0 %v767
    %v769 = vand.u32 %v625, 4294901760
    %v770 = vsub.f32 %v625, %v769
    %v771 = vand.u32 %v770, 4294901760
    %v772 = vsub.f32 %v770, %v771
    %v773 = vand.u32 %v772, 4294901760
    %774 = vmatpush.msra.mxu0 %v773
    %v775 = vand.u32 %v624, 4294901760
    %v776 = vsub.f32 %v624, %v775
    %v777 = vand.u32 %v776, 4294901760
    %v778 = vsub.f32 %v776, %v777
    %v779 = vand.u32 %v778, 4294901760
    %780 = vmatpush.msra.mxu0 %v779
    %v781 = vand.u32 %v623, 4294901760
    %782 = vmatmul.f32.gmra.mxu0 %v781
    %v783 = vpop.f32.mrf.mxu0
    %v784 = vadd.f32 %v683, %v783
    %785 = vdwg.mxu0
    %v786 = vand.u32 %v639, 4294901760
    %v787 = vsub.f32 %v639, %v786
    %788 = vmatpush.msra.mxu0 %v787
    %v789 = vand.u32 %v638, 4294901760
    %v790 = vsub.f32 %v638, %v789
    %791 = vmatpush.msra.mxu0 %v790
    %v792 = vand.u32 %v637, 4294901760
    %v793 = vsub.f32 %v637, %v792
    %794 = vmatpush.msra.mxu0 %v793
    %v795 = vand.u32 %v636, 4294901760
    %v796 = vsub.f32 %v636, %v795
    %797 = vmatpush.msra.mxu0 %v796
    %v798 = vand.u32 %v635, 4294901760
    %v799 = vsub.f32 %v635, %v798
    %800 = vmatpush.msra.mxu0 %v799
    %v801 = vand.u32 %v634, 4294901760
    %v802 = vsub.f32 %v634, %v801
    %803 = vmatpush.msra.mxu0 %v802
    %v804 = vand.u32 %v633, 4294901760
    %v805 = vsub.f32 %v633, %v804
    %806 = vmatpush.msra.mxu0 %v805
    %v807 = vand.u32 %v632, 4294901760
    %v808 = vsub.f32 %v632, %v807
    %809 = vmatpush.msra.mxu0 %v808
    %v810 = vand.u32 %v631, 4294901760
    %v811 = vsub.f32 %v631, %v810
    %812 = vmatpush.msra.mxu0 %v811
    %v813 = vand.u32 %v630, 4294901760
    %v814 = vsub.f32 %v630, %v813
    %815 = vmatpush.msra.mxu0 %v814
    %v816 = vand.u32 %v629, 4294901760
    %v817 = vsub.f32 %v629, %v816
    %818 = vmatpush.msra.mxu0 %v817
    %v819 = vand.u32 %v628, 4294901760
    %v820 = vsub.f32 %v628, %v819
    %821 = vmatpush.msra.mxu0 %v820
    %v822 = vand.u32 %v627, 4294901760
    %v823 = vsub.f32 %v627, %v822
    %824 = vmatpush.msra.mxu0 %v823
    %v825 = vand.u32 %v626, 4294901760
    %v826 = vsub.f32 %v626, %v825
    %827 = vmatpush.msra.mxu0 %v826
    %v828 = vand.u32 %v625, 4294901760
    %v829 = vsub.f32 %v625, %v828
    %830 = vmatpush.msra.mxu0 %v829
    %v831 = vand.u32 %v624, 4294901760
    %v832 = vsub.f32 %v624, %v831
    %833 = vmatpush.msra.mxu0 %v832
    %v834 = vand.u32 %v623, 4294901760
    %v835 = vsub.f32 %v623, %v834
    %836 = vmatmul.f32.gmra.mxu0 %v835
    %v837 = vpop.f32.mrf.mxu0
    %v838 = vadd.f32 %v784, %v837
    %839 = vdwg.mxu0
    %v840 = vand.u32 %v639, 4294901760
    %841 = vmatpush.msra.mxu0 %v840
    %v842 = vand.u32 %v638, 4294901760
    %843 = vmatpush.msra.mxu0 %v842
    %v844 = vand.u32 %v637, 4294901760
    %845 = vmatpush.msra.mxu0 %v844
    %v846 = vand.u32 %v636, 4294901760
    %847 = vmatpush.msra.mxu0 %v846
    %v848 = vand.u32 %v635, 4294901760
    %849 = vmatpush.msra.mxu0 %v848
    %v850 = vand.u32 %v634, 4294901760
    %851 = vmatpush.msra.mxu0 %v850
    %v852 = vand.u32 %v633, 4294901760
    %853 = vmatpush.msra.mxu0 %v852
    %v854 = vand.u32 %v632, 4294901760
    %855 = vmatpush.msra.mxu0 %v854
    %v856 = vand.u32 %v631, 4294901760
    %857 = vmatpush.msra.mxu0 %v856
    %v858 = vand.u32 %v630, 4294901760
    %859 = vmatpush.msra.mxu0 %v858
    %v860 = vand.u32 %v629, 4294901760
    %861 = vmatpush.msra.mxu0 %v860
    %v862 = vand.u32 %v628, 4294901760
    %863 = vmatpush.msra.mxu0 %v862
    %v864 = vand.u32 %v627, 4294901760
    %865 = vmatpush.msra.mxu0 %v864
    %v866 = vand.u32 %v626, 4294901760
    %867 = vmatpush.msra.mxu0 %v866
    %v868 = vand.u32 %v625, 4294901760
    %869 = vmatpush.msra.mxu0 %v868
    %v870 = vand.u32 %v624, 4294901760
    %871 = vmatpush.msra.mxu0 %v870
    %v872 = vand.u32 %v623, 4294901760
    %v873 = vsub.f32 %v623, %v872
    %v874 = vand.u32 %v873, 4294901760
    %875 = vmatmul.f32.gmra.mxu0 %v874
    %v876 = vpop.f32.mrf.mxu0
    %v877 = vadd.f32 %v838, %v876
    %878 = vdwg.mxu0
    %v879 = vand.u32 %v639, 4294901760
    %v880 = vsub.f32 %v639, %v879
    %v881 = vand.u32 %v880, 4294901760
    %882 = vmatpush.msra.mxu0 %v881
    %v883 = vand.u32 %v638, 4294901760
    %v884 = vsub.f32 %v638, %v883
    %v885 = vand.u32 %v884, 4294901760
    %886 = vmatpush.msra.mxu0 %v885
    %v887 = vand.u32 %v637, 4294901760
    %v888 = vsub.f32 %v637, %v887
    %v889 = vand.u32 %v888, 4294901760
    %890 = vmatpush.msra.mxu0 %v889
    %v891 = vand.u32 %v636, 4294901760
    %v892 = vsub.f32 %v636, %v891
    %v893 = vand.u32 %v892, 4294901760
    %894 = vmatpush.msra.mxu0 %v893
    %v895 = vand.u32 %v635, 4294901760
    %v896 = vsub.f32 %v635, %v895
    %v897 = vand.u32 %v896, 4294901760
    %898 = vmatpush.msra.mxu0 %v897
    %v899 = vand.u32 %v634, 4294901760
    %v900 = vsub.f32 %v634, %v899
    %v901 = vand.u32 %v900, 4294901760
    %902 = vmatpush.msra.mxu0 %v901
    %v903 = vand.u32 %v633, 4294901760
    %v904 = vsub.f32 %v633, %v903
    %v905 = vand.u32 %v904, 4294901760
    %906 = vmatpush.msra.mxu0 %v905
    %v907 = vand.u32 %v632, 4294901760
    %v908 = vsub.f32 %v632, %v907
    %v909 = vand.u32 %v908, 4294901760
    %910 = vmatpush.msra.mxu0 %v909
    %v911 = vand.u32 %v631, 4294901760
    %v912 = vsub.f32 %v631, %v911
    %v913 = vand.u32 %v912, 4294901760
    %914 = vmatpush.msra.mxu0 %v913
    %v915 = vand.u32 %v630, 4294901760
    %v916 = vsub.f32 %v630, %v915
    %v917 = vand.u32 %v916, 4294901760
    %918 = vmatpush.msra.mxu0 %v917
    %v919 = vand.u32 %v629, 4294901760
    %v920 = vsub.f32 %v629, %v919
    %v921 = vand.u32 %v920, 4294901760
    %922 = vmatpush.msra.mxu0 %v921
    %v923 = vand.u32 %v628, 4294901760
    %v924 = vsub.f32 %v628, %v923
    %v925 = vand.u32 %v924, 4294901760
    %926 = vmatpush.msra.mxu0 %v925
    %v927 = vand.u32 %v627, 4294901760
    %v928 = vsub.f32 %v627, %v927
    %v929 = vand.u32 %v928, 4294901760
    %930 = vmatpush.msra.mxu0 %v929
    %v931 = vand.u32 %v626, 4294901760
    %v932 = vsub.f32 %v626, %v931
    %v933 = vand.u32 %v932, 4294901760
    %934 = vmatpush.msra.mxu0 %v933
    %v935 = vand.u32 %v625, 4294901760
    %v936 = vsub.f32 %v625, %v935
    %v937 = vand.u32 %v936, 4294901760
    %938 = vmatpush.msra.mxu0 %v937
    %v939 = vand.u32 %v624, 4294901760
    %v940 = vsub.f32 %v624, %v939
    %v941 = vand.u32 %v940, 4294901760
    %942 = vmatpush.msra.mxu0 %v941
    %v943 = vand.u32 %v623, 4294901760
    %944 = vmatmul.f32.gmra.mxu0 %v943
    %v945 = vpop.f32.mrf.mxu0
    %v946 = vadd.f32 %v877, %v945
    %947 = vdwg.mxu0
    %v948 = vand.u32 %v639, 4294901760
    %949 = vmatpush.msra.mxu0 %v948
    %v950 = vand.u32 %v638, 4294901760
    %951 = vmatpush.msra.mxu0 %v950
    %v952 = vand.u32 %v637, 4294901760
    %953 = vmatpush.msra.mxu0 %v952
    %v954 = vand.u32 %v636, 4294901760
    %955 = vmatpush.msra.mxu0 %v954
    %v956 = vand.u32 %v635, 4294901760
    %957 = vmatpush.msra.mxu0 %v956
    %v958 = vand.u32 %v634, 4294901760
    %959 = vmatpush.msra.mxu0 %v958
    %v960 = vand.u32 %v633, 4294901760
    %961 = vmatpush.msra.mxu0 %v960
    %v962 = vand.u32 %v632, 4294901760
    %963 = vmatpush.msra.mxu0 %v962
    %v964 = vand.u32 %v631, 4294901760
    %965 = vmatpush.msra.mxu0 %v964
    %v966 = vand.u32 %v630, 4294901760
    %967 = vmatpush.msra.mxu0 %v966
    %v968 = vand.u32 %v629, 4294901760
    %969 = vmatpush.msra.mxu0 %v968
    %v970 = vand.u32 %v628, 4294901760
    %971 = vmatpush.msra.mxu0 %v970
    %v972 = vand.u32 %v627, 4294901760
    %973 = vmatpush.msra.mxu0 %v972
    %v974 = vand.u32 %v626, 4294901760
    %975 = vmatpush.msra.mxu0 %v974
    %v976 = vand.u32 %v625, 4294901760
    %977 = vmatpush.msra.mxu0 %v976
    %v978 = vand.u32 %v624, 4294901760
    %979 = vmatpush.msra.mxu0 %v978
    %v980 = vand.u32 %v623, 4294901760
    %981 = vmatmul.f32.gmra.mxu0 %v980
    %v982 = vpop.f32.mrf.mxu0
    %v983 = vadd.f32 %v946, %v982
    %984 = vdwg.mxu0
    %v985 = vmax.f32 %v983, 0.0
    %v986 = vld [vmem:[%s7] sm:$0xff]
    %v987 = vld [vmem:[%s7 + $0x8] sm:$0xff]
    %v988 = vld [vmem:[%s7 + $0x10] sm:$0xff]
    %v989 = vld [vmem:[%s7 + $0x18] sm:$0xff]
    %v990 = vld [vmem:[%s7 + $0x20] sm:$0xff]
    %v991 = vld [vmem:[%s7 + $0x28] sm:$0xff]
    %v992 = vld [vmem:[%s7 + $0x30] sm:$0xff]
    %v993 = vld [vmem:[%s7 + $0x38] sm:$0xff]
    %v994 = vld [vmem:[%s7 + $0x40] sm:$0xff]
    %v995 = vld [vmem:[%s7 + $0x48] sm:$0xff]
    %v996 = vld [vmem:[%s7 + $0x50] sm:$0xff]
    %v997 = vld [vmem:[%s7 + $0x58] sm:$0xff]
    %v998 = vld [vmem:[%s7 + $0x60] sm:$0xff]
    %v999 = vld [vmem:[%s7 + $0x68] sm:$0xff]
    %v1000 = vld [vmem:[%s7 + $0x70] sm:$0xff]
    %v1001 = vld [vmem:[%s7 + $0x78] sm:$0xff]
    %v1002 = vld [vmem:[%s8] sm:$0x1]
    %v1004 = vperm.slane %v1002, 0
    %v1006 = vand.u32 %v1001, 4294901760
    %1007 = vmatpush.msra.mxu0 %v1006
    %v1008 = vand.u32 %v1000, 4294901760
    %1009 = vmatpush.msra.mxu0 %v1008
    %v1010 = vand.u32 %v999, 4294901760
    %1011 = vmatpush.msra.mxu0 %v1010
    %v1012 = vand.u32 %v998, 4294901760
    %1013 = vmatpush.msra.mxu0 %v1012
    %v1014 = vand.u32 %v997, 4294901760
    %1015 = vmatpush.msra.mxu0 %v1014
    %v1016 = vand.u32 %v996, 4294901760
    %1017 = vmatpush.msra.mxu0 %v1016
    %v1018 = vand.u32 %v995, 4294901760
    %1019 = vmatpush.msra.mxu0 %v1018
    %v1020 = vand.u32 %v994, 4294901760
    %1021 = vmatpush.msra.mxu0 %v1020
    %v1022 = vand.u32 %v993, 4294901760
    %1023 = vmatpush.msra.mxu0 %v1022
    %v1024 = vand.u32 %v992, 4294901760
    %1025 = vmatpush.msra.mxu0 %v1024
    %v1026 = vand.u32 %v991, 4294901760
    %1027 = vmatpush.msra.mxu0 %v1026
    %v1028 = vand.u32 %v990, 4294901760
    %1029 = vmatpush.msra.mxu0 %v1028
    %v1030 = vand.u32 %v989, 4294901760
    %1031 = vmatpush.msra.mxu0 %v1030
    %v1032 = vand.u32 %v988, 4294901760
    %1033 = vmatpush.msra.mxu0 %v1032
    %v1034 = vand.u32 %v987, 4294901760
    %1035 = vmatpush.msra.mxu0 %v1034
    %v1036 = vand.u32 %v986, 4294901760
    %1037 = vmatpush.msra.mxu0 %v1036
    %v1038 = vand.u32 %v985, 4294901760
    %v1039 = vsub.f32 %v985, %v1038
    %v1040 = vand.u32 %v1039, 4294901760
    %v1041 = vsub.f32 %v1039, %v1040
    %v1042 = vand.u32 %v1041, 4294901760
    %1043 = vmatmul.f32.gmra.mxu0 %v1042
    %v1044 = vpop.f32.mrf.mxu0
    %v1045 = vadd.f32 %v1004, %v1044
    %1046 = vdwg.mxu0
    %v1047 = vand.u32 %v1001, 4294901760
    %v1048 = vsub.f32 %v1001, %v1047
    %v1049 = vand.u32 %v1048, 4294901760
    %v1050 = vsub.f32 %v1048, %v1049
    %v1051 = vand.u32 %v1050, 4294901760
    %1052 = vmatpush.msra.mxu0 %v1051
    %v1053 = vand.u32 %v1000, 4294901760
    %v1054 = vsub.f32 %v1000, %v1053
    %v1055 = vand.u32 %v1054, 4294901760
    %v1056 = vsub.f32 %v1054, %v1055
    %v1057 = vand.u32 %v1056, 4294901760
    %1058 = vmatpush.msra.mxu0 %v1057
    %v1059 = vand.u32 %v999, 4294901760
    %v1060 = vsub.f32 %v999, %v1059
    %v1061 = vand.u32 %v1060, 4294901760
    %v1062 = vsub.f32 %v1060, %v1061
    %v1063 = vand.u32 %v1062, 4294901760
    %1064 = vmatpush.msra.mxu0 %v1063
    %v1065 = vand.u32 %v998, 4294901760
    %v1066 = vsub.f32 %v998, %v1065
    %v1067 = vand.u32 %v1066, 4294901760
    %v1068 = vsub.f32 %v1066, %v1067
    %v1069 = vand.u32 %v1068, 4294901760
    %1070 = vmatpush.msra.mxu0 %v1069
    %v1071 = vand.u32 %v997, 4294901760
    %v1072 = vsub.f32 %v997, %v1071
    %v1073 = vand.u32 %v1072, 4294901760
    %v1074 = vsub.f32 %v1072, %v1073
    %v1075 = vand.u32 %v1074, 4294901760
    %1076 = vmatpush.msra.mxu0 %v1075
    %v1077 = vand.u32 %v996, 4294901760
    %v1078 = vsub.f32 %v996, %v1077
    %v1079 = vand.u32 %v1078, 4294901760
    %v1080 = vsub.f32 %v1078, %v1079
    %v1081 = vand.u32 %v1080, 4294901760
    %1082 = vmatpush.msra.mxu0 %v1081
    %v1083 = vand.u32 %v995, 4294901760
    %v1084 = vsub.f32 %v995, %v1083
    %v1085 = vand.u32 %v1084, 4294901760
    %v1086 = vsub.f32 %v1084, %v1085
    %v1087 = vand.u32 %v1086, 4294901760
    %1088 = vmatpush.msra.mxu0 %v1087
    %v1089 = vand.u32 %v994, 4294901760
    %v1090 = vsub.f32 %v994, %v1089
    %v1091 = vand.u32 %v1090, 4294901760
    %v1092 = vsub.f32 %v1090, %v1091
    %v1093 = vand.u32 %v1092, 4294901760
    %1094 = vmatpush.msra.mxu0 %v1093
    %v1095 = vand.u32 %v993, 4294901760
    %v1096 = vsub.f32 %v993, %v1095
    %v1097 = vand.u32 %v1096, 4294901760
    %v1098 = vsub.f32 %v1096, %v1097
    %v1099 = vand.u32 %v1098, 4294901760
    %1100 = vmatpush.msra.mxu0 %v1099
    %v1101 = vand.u32 %v992, 4294901760
    %v1102 = vsub.f32 %v992, %v1101
    %v1103 = vand.u32 %v1102, 4294901760
    %v1104 = vsub.f32 %v1102, %v1103
    %v1105 = vand.u32 %v1104, 4294901760
    %1106 = vmatpush.msra.mxu0 %v1105
    %v1107 = vand.u32 %v991, 4294901760
    %v1108 = vsub.f32 %v991, %v1107
    %v1109 = vand.u32 %v1108, 4294901760
    %v1110 = vsub.f32 %v1108, %v1109
    %v1111 = vand.u32 %v1110, 4294901760
    %1112 = vmatpush.msra.mxu0 %v1111
    %v1113 = vand.u32 %v990, 4294901760
    %v1114 = vsub.f32 %v990, %v1113
    %v1115 = vand.u32 %v1114, 4294901760
    %v1116 = vsub.f32 %v1114, %v1115
    %v1117 = vand.u32 %v1116, 4294901760
    %1118 = vmatpush.msra.mxu0 %v1117
    %v1119 = vand.u32 %v989, 4294901760
    %v1120 = vsub.f32 %v989, %v1119
    %v1121 = vand.u32 %v1120, 4294901760
    %v1122 = vsub.f32 %v1120, %v1121
    %v1123 = vand.u32 %v1122, 4294901760
    %1124 = vmatpush.msra.mxu0 %v1123
    %v1125 = vand.u32 %v988, 4294901760
    %v1126 = vsub.f32 %v988, %v1125
    %v1127 = vand.u32 %v1126, 4294901760
    %v1128 = vsub.f32 %v1126, %v1127
    %v1129 = vand.u32 %v1128, 4294901760
    %1130 = vmatpush.msra.mxu0 %v1129
    %v1131 = vand.u32 %v987, 4294901760
    %v1132 = vsub.f32 %v987, %v1131
    %v1133 = vand.u32 %v1132, 4294901760
    %v1134 = vsub.f32 %v1132, %v1133
    %v1135 = vand.u32 %v1134, 4294901760
    %1136 = vmatpush.msra.mxu0 %v1135
    %v1137 = vand.u32 %v986, 4294901760
    %v1138 = vsub.f32 %v986, %v1137
    %v1139 = vand.u32 %v1138, 4294901760
    %v1140 = vsub.f32 %v1138, %v1139
    %v1141 = vand.u32 %v1140, 4294901760
    %1142 = vmatpush.msra.mxu0 %v1141
    %v1143 = vand.u32 %v985, 4294901760
    %1144 = vmatmul.f32.gmra.mxu0 %v1143
    %v1145 = vpop.f32.mrf.mxu0
    %v1146 = vadd.f32 %v1045, %v1145
    %1147 = vdwg.mxu0
    %v1148 = vand.u32 %v1001, 4294901760
    %v1149 = vsub.f32 %v1001, %v1148
    %1150 = vmatpush.msra.mxu0 %v1149
    %v1151 = vand.u32 %v1000, 4294901760
    %v1152 = vsub.f32 %v1000, %v1151
    %1153 = vmatpush.msra.mxu0 %v1152
    %v1154 = vand.u32 %v999, 4294901760
    %v1155 = vsub.f32 %v999, %v1154
    %1156 = vmatpush.msra.mxu0 %v1155
    %v1157 = vand.u32 %v998, 4294901760
    %v1158 = vsub.f32 %v998, %v1157
    %1159 = vmatpush.msra.mxu0 %v1158
    %v1160 = vand.u32 %v997, 4294901760
    %v1161 = vsub.f32 %v997, %v1160
    %1162 = vmatpush.msra.mxu0 %v1161
    %v1163 = vand.u32 %v996, 4294901760
    %v1164 = vsub.f32 %v996, %v1163
    %1165 = vmatpush.msra.mxu0 %v1164
    %v1166 = vand.u32 %v995, 4294901760
    %v1167 = vsub.f32 %v995, %v1166
    %1168 = vmatpush.msra.mxu0 %v1167
    %v1169 = vand.u32 %v994, 4294901760
    %v1170 = vsub.f32 %v994, %v1169
    %1171 = vmatpush.msra.mxu0 %v1170
    %v1172 = vand.u32 %v993, 4294901760
    %v1173 = vsub.f32 %v993, %v1172
    %1174 = vmatpush.msra.mxu0 %v1173
    %v1175 = vand.u32 %v992, 4294901760
    %v1176 = vsub.f32 %v992, %v1175
    %1177 = vmatpush.msra.mxu0 %v1176
    %v1178 = vand.u32 %v991, 4294901760
    %v1179 = vsub.f32 %v991, %v1178
    %1180 = vmatpush.msra.mxu0 %v1179
    %v1181 = vand.u32 %v990, 4294901760
    %v1182 = vsub.f32 %v990, %v1181
    %1183 = vmatpush.msra.mxu0 %v1182
    %v1184 = vand.u32 %v989, 4294901760
    %v1185 = vsub.f32 %v989, %v1184
    %1186 = vmatpush.msra.mxu0 %v1185
    %v1187 = vand.u32 %v988, 4294901760
    %v1188 = vsub.f32 %v988, %v1187
    %1189 = vmatpush.msra.mxu0 %v1188
    %v1190 = vand.u32 %v987, 4294901760
    %v1191 = vsub.f32 %v987, %v1190
    %1192 = vmatpush.msra.mxu0 %v1191
    %v1193 = vand.u32 %v986, 4294901760
    %v1194 = vsub.f32 %v986, %v1193
    %1195 = vmatpush.msra.mxu0 %v1194
    %v1196 = vand.u32 %v985, 4294901760
    %v1197 = vsub.f32 %v985, %v1196
    %1198 = vmatmul.f32.gmra.mxu0 %v1197
    %v1199 = vpop.f32.mrf.mxu0
    %v1200 = vadd.f32 %v1146, %v1199
    %1201 = vdwg.mxu0
    %v1202 = vand.u32 %v1001, 4294901760
    %1203 = vmatpush.msra.mxu0 %v1202
    %v1204 = vand.u32 %v1000, 4294901760
    %1205 = vmatpush.msra.mxu0 %v1204
    %v1206 = vand.u32 %v999, 4294901760
    %1207 = vmatpush.msra.mxu0 %v1206
    %v1208 = vand.u32 %v998, 4294901760
    %1209 = vmatpush.msra.mxu0 %v1208
    %v1210 = vand.u32 %v997, 4294901760
    %1211 = vmatpush.msra.mxu0 %v1210
    %v1212 = vand.u32 %v996, 4294901760
    %1213 = vmatpush.msra.mxu0 %v1212
    %v1214 = vand.u32 %v995, 4294901760
    %1215 = vmatpush.msra.mxu0 %v1214
    %v1216 = vand.u32 %v994, 4294901760
    %1217 = vmatpush.msra.mxu0 %v1216
    %v1218 = vand.u32 %v993, 4294901760
    %1219 = vmatpush.msra.mxu0 %v1218
    %v1220 = vand.u32 %v992, 4294901760
    %1221 = vmatpush.msra.mxu0 %v1220
    %v1222 = vand.u32 %v991, 4294901760
    %1223 = vmatpush.msra.mxu0 %v1222
    %v1224 = vand.u32 %v990, 4294901760
    %1225 = vmatpush.msra.mxu0 %v1224
    %v1226 = vand.u32 %v989, 4294901760
    %1227 = vmatpush.msra.mxu0 %v1226
    %v1228 = vand.u32 %v988, 4294901760
    %1229 = vmatpush.msra.mxu0 %v1228
    %v1230 = vand.u32 %v987, 4294901760
    %1231 = vmatpush.msra.mxu0 %v1230
    %v1232 = vand.u32 %v986, 4294901760
    %1233 = vmatpush.msra.mxu0 %v1232
    %v1234 = vand.u32 %v985, 4294901760
    %v1235 = vsub.f32 %v985, %v1234
    %v1236 = vand.u32 %v1235, 4294901760
    %1237 = vmatmul.f32.gmra.mxu0 %v1236
    %v1238 = vpop.f32.mrf.mxu0
    %v1239 = vadd.f32 %v1200, %v1238
    %1240 = vdwg.mxu0
    %v1241 = vand.u32 %v1001, 4294901760
    %v1242 = vsub.f32 %v1001, %v1241
    %v1243 = vand.u32 %v1242, 4294901760
    %1244 = vmatpush.msra.mxu0 %v1243
    %v1245 = vand.u32 %v1000, 4294901760
    %v1246 = vsub.f32 %v1000, %v1245
    %v1247 = vand.u32 %v1246, 4294901760
    %1248 = vmatpush.msra.mxu0 %v1247
    %v1249 = vand.u32 %v999, 4294901760
    %v1250 = vsub.f32 %v999, %v1249
    %v1251 = vand.u32 %v1250, 4294901760
    %1252 = vmatpush.msra.mxu0 %v1251
    %v1253 = vand.u32 %v998, 4294901760
    %v1254 = vsub.f32 %v998, %v1253
    %v1255 = vand.u32 %v1254, 4294901760
    %1256 = vmatpush.msra.mxu0 %v1255
    %v1257 = vand.u32 %v997, 4294901760
    %v1258 = vsub.f32 %v997, %v1257
    %v1259 = vand.u32 %v1258, 4294901760
    %1260 = vmatpush.msra.mxu0 %v1259
    %v1261 = vand.u32 %v996, 4294901760
    %v1262 = vsub.f32 %v996, %v1261
    %v1263 = vand.u32 %v1262, 4294901760
    %1264 = vmatpush.msra.mxu0 %v1263
    %v1265 = vand.u32 %v995, 4294901760
    %v1266 = vsub.f32 %v995, %v1265
    %v1267 = vand.u32 %v1266, 4294901760
    %1268 = vmatpush.msra.mxu0 %v1267
    %v1269 = vand.u32 %v994, 4294901760
    %v1270 = vsub.f32 %v994, %v1269
    %v1271 = vand.u32 %v1270, 4294901760
    %1272 = vmatpush.msra.mxu0 %v1271
    %v1273 = vand.u32 %v993, 4294901760
    %v1274 = vsub.f32 %v993, %v1273
    %v1275 = vand.u32 %v1274, 4294901760
    %1276 = vmatpush.msra.mxu0 %v1275
    %v1277 = vand.u32 %v992, 4294901760
    %v1278 = vsub.f32 %v992, %v1277
    %v1279 = vand.u32 %v1278, 4294901760
    %1280 = vmatpush.msra.mxu0 %v1279
    %v1281 = vand.u32 %v991, 4294901760
    %v1282 = vsub.f32 %v991, %v1281
    %v1283 = vand.u32 %v1282, 4294901760
    %1284 = vmatpush.msra.mxu0 %v1283
    %v1285 = vand.u32 %v990, 4294901760
    %v1286 = vsub.f32 %v990, %v1285
    %v1287 = vand.u32 %v1286, 4294901760
    %1288 = vmatpush.msra.mxu0 %v1287
    %v1289 = vand.u32 %v989, 4294901760
    %v1290 = vsub.f32 %v989, %v1289
    %v1291 = vand.u32 %v1290, 4294901760
    %1292 = vmatpush.msra.mxu0 %v1291
    %v1293 = vand.u32 %v988, 4294901760
    %v1294 = vsub.f32 %v988, %v1293
    %v1295 = vand.u32 %v1294, 4294901760
    %1296 = vmatpush.msra.mxu0 %v1295
    %v1297 = vand.u32 %v987, 4294901760
    %v1298 = vsub.f32 %v987, %v1297
    %v1299 = vand.u32 %v1298, 4294901760
    %1300 = vmatpush.msra.mxu0 %v1299
    %v1301 = vand.u32 %v986, 4294901760
    %v1302 = vsub.f32 %v986, %v1301
    %v1303 = vand.u32 %v1302, 4294901760
    %1304 = vmatpush.msra.mxu0 %v1303
    %v1305 = vand.u32 %v985, 4294901760
    %1306 = vmatmul.f32.gmra.mxu0 %v1305
    %v1307 = vpop.f32.mrf.mxu0
    %v1308 = vadd.f32 %v1239, %v1307
    %1309 = vdwg.mxu0
    %v1310 = vand.u32 %v1001, 4294901760
    %1311 = vmatpush.msra.mxu0 %v1310
    %v1312 = vand.u32 %v1000, 4294901760
    %1313 = vmatpush.msra.mxu0 %v1312
    %v1314 = vand.u32 %v999, 4294901760
    %1315 = vmatpush.msra.mxu0 %v1314
    %v1316 = vand.u32 %v998, 4294901760
    %1317 = vmatpush.msra.mxu0 %v1316
    %v1318 = vand.u32 %v997, 4294901760
    %1319 = vmatpush.msra.mxu0 %v1318
    %v1320 = vand.u32 %v996, 4294901760
    %1321 = vmatpush.msra.mxu0 %v1320
    %v1322 = vand.u32 %v995, 4294901760
    %1323 = vmatpush.msra.mxu0 %v1322
    %v1324 = vand.u32 %v994, 4294901760
    %1325 = vmatpush.msra.mxu0 %v1324
    %v1326 = vand.u32 %v993, 4294901760
    %1327 = vmatpush.msra.mxu0 %v1326
    %v1328 = vand.u32 %v992, 4294901760
    %1329 = vmatpush.msra.mxu0 %v1328
    %v1330 = vand.u32 %v991, 4294901760
    %1331 = vmatpush.msra.mxu0 %v1330
    %v1332 = vand.u32 %v990, 4294901760
    %1333 = vmatpush.msra.mxu0 %v1332
    %v1334 = vand.u32 %v989, 4294901760
    %1335 = vmatpush.msra.mxu0 %v1334
    %v1336 = vand.u32 %v988, 4294901760
    %1337 = vmatpush.msra.mxu0 %v1336
    %v1338 = vand.u32 %v987, 4294901760
    %1339 = vmatpush.msra.mxu0 %v1338
    %v1340 = vand.u32 %v986, 4294901760
    %1341 = vmatpush.msra.mxu0 %v1340
    %v1342 = vand.u32 %v985, 4294901760
    %1343 = vmatmul.f32.gmra.mxu0 %v1342
    %v1344 = vpop.f32.mrf.mxu0
    %v1345 = vadd.f32 %v1308, %v1344
    %1346 = vdwg.mxu0
    %v1347 = vtanh.pop %v1345
    %1348 = vst.msk [vmem:[#allocation7] sm:$0xff] %vm72, %v1347
    // Predicated region
    $region46: #{_forward_impl.1} parent=1 // pred_check
      _
    $region47: #{_forward_impl.1} parent=1 // pred_check_branch
      %1350 = sbr.rel (0) target = $region49
    $region48: #{_forward_impl.1} parent=1 // pred_region
      %1352 = vsyncadd [#allocation4], 0
      %s1354 = sshll.u32 [#allocation7], 4
      %s1355 = int_to_ptr.vmem [resolvable:$true] %s1354
      %s1356 = sshll.u32 %s9, 4
      %s1357 = int_to_ptr.hbm [resolvable:$true] %s1356
      %1359 = dma.vmem_to_hbm [thread:$0]  %s1355, 128, %s1357, [#allocation4]
    $region49: #{_forward_impl.1} parent=1 // pred_fallthru
      _
    // Predicated region
    $region50: #{_forward_impl.1} parent=1 // pred_check
      _
    $region51: #{_forward_impl.1} parent=1 // pred_check_branch
      %1361 = sbr.rel (0) target = $region53
    $region52: #{_forward_impl.1} parent=1 // pred_region
      %1363 = dma.done [#allocation4], 128
    $region53: #{_forward_impl.1} parent=1 // pred_fallthru
      _
    %1364 = vsyncpa [#allocation3], 1
    %1365 = vsyncpa [#allocation6], 1
    %1366 = vsyncpa [#allocation4], 1

// kernel: _forward_impl.1
$region0: #{_forward_impl.1}
  #allocation0 [shape = 'u32[]', space=smem, size = 0x4, offset = 0x4, fixed_abs, tag = 'smem constant byte address 0x4 - core index']
  #allocation1 [shape = 'u32[72,128]{1,0:T(1,128)}', space=vmem, size = 0x9000, scoped, tag = 'internal scratch']
  %s0 = inlined_call_operand.hbm [shape: f32[8,32], index: 0, kind: input, shape index: {}]
  %s1 = inlined_call_operand.vmem [shape: f32[32,128], index: 1, kind: input, shape index: {}]
  %s2 = inlined_call_operand.vmem [shape: f32[1,128], index: 2, kind: input, shape index: {}]
  %s3 = inlined_call_operand.vmem [shape: f32[128,128], index: 3, kind: input, shape index: {}]
  %s4 = inlined_call_operand.vmem [shape: f32[1,128], index: 4, kind: input, shape index: {}]
  %s5 = inlined_call_operand.hbm [shape: f32[128,128], index: 5, kind: input, shape index: {}]
  %s6 = inlined_call_operand.vmem [shape: f32[1,128], index: 6, kind: input, shape index: {}]
  %s7 = inlined_call_operand.vmem [shape: f32[128,32], index: 7, kind: input, shape index: {}]
  %s8 = inlined_call_operand.vmem [shape: f32[1,32], index: 8, kind: input, shape index: {}]
  %s9 = inlined_call_operand.hbm [shape: f32[8,32], index: 9, kind: output, shape index: {}]
  %s10 = sld [smem:[#allocation0]]
  $region54: #{_forward_impl.1} parent=0
    _
  %s12 = ssub.s32 1, %s10
  %s13 = scalar_select 0, %s12, %s10
  $region1: #{_forward_impl.1} parent=0
    #allocation2 [shape = 'u8[4096]{0}', space=vmem, size = 0x1000, scoped, tag = 'input window, operand 0, single buffered']
    #allocation3 [shape = 's32[1]{0}', space=sflag, size = 0x4, scoped, tag = 'scoped memory for _forward_impl.1']
    #allocation4 [shape = 's32[1]{0}', space=sflag, size = 0x4, scoped, tag = 'scoped memory for _forward_impl.1']
    #allocation5 [shape = 'u8[65536]{0}', space=vmem, size = 0x10000, scoped, tag = 'input window, operand 5, single buffered']
    #allocation6 [shape = 's32[1]{0}', space=sflag, size = 0x4, scoped, tag = 'scoped memory for _forward_impl.1']
    #allocation7 [shape = 'u8[4096]{0}', space=vmem, size = 0x1000, scoped, tag = 'output window, operand 0, single buffered']
    %14 = vsyncpa [#allocation3], 0
    %15 = vsyncpa [#allocation6], 0
    %16 = vsyncpa [#allocation4], 0
    // Predicated region
    $region2: #{_forward_impl.1} parent=1 // pred_check
      _
    $region3: #{_forward_impl.1} parent=1 // pred_check_branch
      %18 = sbr.rel (0) target = $region5
    $region4: #{_forward_impl.1} parent=1 // pred_region
      %20 = vsyncadd [#allocation3], 0
      %s22 = sshll.u32 %s0, 4
      %s23 = int_to_ptr.hbm [resolvable:$true] %s22
      %s24 = sshll.u32 [#allocation2], 4
      %s25 = int_to_ptr.vmem [resolvable:$true] %s24
      %27 = dma.hbm_to_vmem [thread:$0]  %s23, 128, %s25, [#allocation3]
    $region5: #{_forward_impl.1} parent=1 // pred_fallthru
      _
    // Predicated region
    $region6: #{_forward_impl.1} parent=1 // pred_check
      _
    $region7: #{_forward_impl.1} parent=1 // pred_check_branch
      %29 = sbr.rel (0) target = $region9
    $region8: #{_forward_impl.1} parent=1 // pred_region
      _
    $region9: #{_forward_impl.1} parent=1 // pred_fallthru
      _
    // Predicated region
    $region10: #{_forward_impl.1} parent=1 // pred_check
      _
    $region11: #{_forward_impl.1} parent=1 // pred_check_branch
      %31 = sbr.rel (0) target = $region13
    $region12: #{_forward_impl.1} parent=1 // pred_region
      _
    $region13: #{_forward_impl.1} parent=1 // pred_fallthru
      _
    // Predicated region
    $region14: #{_forward_impl.1} parent=1 // pred_check
      _
    $region15: #{_forward_impl.1} parent=1 // pred_check_branch
      %33 = sbr.rel (0) target = $region17
    $region16: #{_forward_impl.1} parent=1 // pred_region
      _
    $region17: #{_forward_impl.1} parent=1 // pred_fallthru
      _
    // Predicated region
    $region18: #{_forward_impl.1} parent=1 // pred_check
      _
    $region19: #{_forward_impl.1} parent=1 // pred_check_branch
      %35 = sbr.rel (0) target = $region21
    $region20: #{_forward_impl.1} parent=1 // pred_region
      _
    $region21: #{_forward_impl.1} parent=1 // pred_fallthru
      _
    // Predicated region
    $region22: #{_forward_impl.1} parent=1 // pred_check
      _
    $region23: #{_forward_impl.1} parent=1 // pred_check_branch
      %37 = sbr.rel (0) target = $region25
    $region24: #{_forward_impl.1} parent=1 // pred_region
      %39 = vsyncadd [#allocation6], 0
      %s40 = sshll.u32 %s5, 4
      %s41 = int_to_ptr.hbm [resolvable:$true] %s40
      %s42 = sshll.u32 [#allocation5], 4
      %s43 = int_to_ptr.vmem [resolvable:$true] %s42
      %48 = dma.hbm_to_vmem [thread:$0]  %s41, 2048, %s43, [#allocation6], 128, 128, 8
    $region25: #{_forward_impl.1} parent=1 // pred_fallthru
      _
    // Predicated region
    $region26: #{_forward_impl.1} parent=1 // pred_check
      _
    $region27: #{_forward_impl.1} parent=1 // pred_check_branch
      %50 = sbr.rel (0) target = $region29
    $region28: #{_forward_impl.1} parent=1 // pred_region
      _
    $region29: #{_forward_impl.1} parent=1 // pred_fallthru
      _
    // Predicated region
    $region30: #{_forward_impl.1} parent=1 // pred_check
      _
    $region31: #{_forward_impl.1} parent=1 // pred_check_branch
      %52 = sbr.rel (0) target = $region33
    $region32: #{_forward_impl.1} parent=1 // pred_region
      _
    $region33: #{_forward_impl.1} parent=1 // pred_fallthru
      _
    // Predicated region
    $region34: #{_forward_impl.1} parent=1 // pred_check
      _
    $region35: #{_forward_impl.1} parent=1 // pred_check_branch
      %54 = sbr.rel (0) target = $region37
    $region36: #{_forward_impl.1} parent=1 // pred_region
      _
    $region37: #{_forward_impl.1} parent=1 // pred_fallthru
      _
    // Predicated region
    $region38: #{_forward_impl.1} parent=1 // pred_check
      _
    $region39: #{_forward_impl.1} parent=1 // pred_check_branch
      %56 = sbr.rel (0) target = $region41
    $region40: #{_forward_impl.1} parent=1 // pred_region
      %58 = dma.done [#allocation3], 128
    $region41: #{_forward_impl.1} parent=1 // pred_fallthru
      _
    // Predicated region
    $region42: #{_forward_impl.1} parent=1 // pred_check
      _
    $region43: #{_forward_impl.1} parent=1 // pred_check_branch
      %60 = sbr.rel (0) target = $region45
    $region44: #{_forward_impl.1} parent=1 // pred_region
      %62 = dma.done [#allocation6], 2048
    $region45: #{_forward_impl.1} parent=1 // pred_fallthru
      _
    %v63 = vld [vmem:[#allocation2] sm:$0xff]
    %v64 = vld [vmem:[%s1] sm:$0xff]
    %v65 = vld [vmem:[%s1 + $0x8] sm:$0xff]
    %v66 = vld [vmem:[%s1 + $0x10] sm:$0xff]
    %v67 = vld [vmem:[%s1 + $0x18] sm:$0xff]
    %v68 = vld [vmem:[%s2] sm:$0x1]
    %v70 = vperm.slane %v68, 0
    %vm72 = vcmask 261120
    %v74 = vsel %vm72, %v63, 0
    %76 = vmatpush.msra.mxu0 0.0
    %77 = vmatpush.msra.mxu0 0.0
    %78 = vmatpush.msra.mxu0 0.0
    %79 = vmatpush.msra.mxu0 0.0
    %80 = vmatpush.msra.mxu0 0.0
    %81 = vmatpush.msra.mxu0 0.0
    %82 = vmatpush.msra.mxu0 0.0
    %83 = vmatpush.msra.mxu0 0.0
    %84 = vmatpush.msra.mxu0 0.0
    %85 = vmatpush.msra.mxu0 0.0
    %86 = vmatpush.msra.mxu0 0.0
    %87 = vmatpush.msra.mxu0 0.0
    %v88 = vand.u32 %v67, 4294901760
    %89 = vmatpush.msra.mxu0 %v88
    %v90 = vand.u32 %v66, 4294901760
    %91 = vmatpush.msra.mxu0 %v90
    %v92 = vand.u32 %v65, 4294901760
    %93 = vmatpush.msra.mxu0 %v92
    %v94 = vand.u32 %v64, 4294901760
    %95 = vmatpush.msra.mxu0 %v94
    %v96 = vand.u32 %v74, 4294901760
    %v97 = vsub.f32 %v74, %v96
    %v98 = vand.u32 %v97, 4294901760
    %v99 = vsub.f32 %v97, %v98
    %v100 = vand.u32 %v99, 4294901760
    %101 = vmatmul.f32.gmra.mxu0 %v100
    %v102 = vpop.f32.mrf.mxu0
    %v103 = vadd.f32 %v70, %v102
    %104 = vdwg.mxu0
    %105 = vmatpush.msra.mxu0 0.0
    %106 = vmatpush.msra.mxu0 0.0
    %107 = vmatpush.msra.mxu0 0.0
    %108 = vmatpush.msra.mxu0 0.0
    %109 = vmatpush.msra.mxu0 0.0
    %110 = vmatpush.msra.mxu0 0.0
    %111 = vmatpush.msra.mxu0 0.0
    %112 = vmatpush.msra.mxu0 0.0
    %113 = vmatpush.msra.mxu0 0.0
    %114 = vmatpush.msra.mxu0 0.0
    %115 = vmatpush.msra.mxu0 0.0
    %116 = vmatpush.msra.mxu0 0.0
    %v117 = vand.u32 %v67, 4294901760
    %v118 = vsub.f32 %v67, %v117
    %v119 = vand.u32 %v118, 4294901760
    %v120 = vsub.f32 %v118, %v119
    %v121 = vand.u32 %v120, 4294901760
    %122 = vmatpush.msra.mxu0 %v121
    %v123 = vand.u32 %v66, 4294901760
    %v124 = vsub.f32 %v66, %v123
    %v125 = vand.u32 %v124, 4294901760
    %v126 = vsub.f32 %v124, %v125
    %v127 = vand.u32 %v126, 4294901760
    %128 = vmatpush.msra.mxu0 %v127
    %v129 = vand.u32 %v65, 4294901760
    %v130 = vsub.f32 %v65, %v129
    %v131 = vand.u32 %v130, 4294901760
    %v132 = vsub.f32 %v130, %v131
    %v133 = vand.u32 %v132, 4294901760
    %134 = vmatpush.msra.mxu0 %v133
    %v135 = vand.u32 %v64, 4294901760
    %v136 = vsub.f32 %v64, %v135
    %v137 = vand.u32 %v136, 4294901760
    %v138 = vsub.f32 %v136, %v137
    %v139 = vand.u32 %v138, 4294901760
    %140 = vmatpush.msra.mxu0 %v139
    %v141 = vand.u32 %v74, 4294901760
    %142 = vmatmul.f32.gmra.mxu0 %v141
    %v143 = vpop.f32.mrf.mxu0
    %v144 = vadd.f32 %v103, %v143
    %145 = vdwg.mxu0
    %146 = vmatpush.msra.mxu0 0.0
    %147 = vmatpush.msra.mxu0 0.0
    %148 = vmatpush.msra.mxu0 0.0
    %149 = vmatpush.msra.mxu0 0.0
    %150 = vmatpush.msra.mxu0 0.0
    %151 = vmatpush.msra.mxu0 0.0
    %152 = vmatpush.msra.mxu0 0.0
    %153 = vmatpush.msra.mxu0 0.0
    %154 = vmatpush.msra.mxu0 0.0
    %155 = vmatpush.msra.mxu0 0.0
    %156 = vmatpush.msra.mxu0 0.0
    %157 = vmatpush.msra.mxu0 0.0
    %v158 = vand.u32 %v67, 4294901760
    %v159 = vsub.f32 %v67, %v158
    %160 = vmatpush.msra.mxu0 %v159
    %v161 = vand.u32 %v66, 4294901760
    %v162 = vsub.f32 %v66, %v161
    %163 = vmatpush.msra.mxu0 %v162
    %v164 = vand.u32 %v65, 4294901760
    %v165 = vsub.f32 %v65, %v164
    %166 = vmatpush.msra.mxu0 %v165
    %v167 = vand.u32 %v64, 4294901760
    %v168 = vsub.f32 %v64, %v167
    %169 = vmatpush.msra.mxu0 %v168
    %v170 = vand.u32 %v74, 4294901760
    %v171 = vsub.f32 %v74, %v170
    %172 = vmatmul.f32.gmra.mxu0 %v171
    %v173 = vpop.f32.mrf.mxu0
    %v174 = vadd.f32 %v144, %v173
    %175 = vdwg.mxu0
    %176 = vmatpush.msra.mxu0 0.0
    %177 = vmatpush.msra.mxu0 0.0
    %178 = vmatpush.msra.mxu0 0.0
    %179 = vmatpush.msra.mxu0 0.0
    %180 = vmatpush.msra.mxu0 0.0
    %181 = vmatpush.msra.mxu0 0.0
    %182 = vmatpush.msra.mxu0 0.0
    %183 = vmatpush.msra.mxu0 0.0
    %184 = vmatpush.msra.mxu0 0.0
    %185 = vmatpush.msra.mxu0 0.0
    %186 = vmatpush.msra.mxu0 0.0
    %187 = vmatpush.msra.mxu0 0.0
    %v188 = vand.u32 %v67, 4294901760
    %189 = vmatpush.msra.mxu0 %v188
    %v190 = vand.u32 %v66, 4294901760
    %191 = vmatpush.msra.mxu0 %v190
    %v192 = vand.u32 %v65, 4294901760
    %193 = vmatpush.msra.mxu0 %v192
    %v194 = vand.u32 %v64, 4294901760
    %195 = vmatpush.msra.mxu0 %v194
    %v196 = vand.u32 %v74, 4294901760
    %v197 = vsub.f32 %v74, %v196
    %v198 = vand.u32 %v197, 4294901760
    %199 = vmatmul.f32.gmra.mxu0 %v198
    %v200 = vpop.f32.mrf.mxu0
    %v201 = vadd.f32 %v174, %v200
    %202 = vdwg.mxu0
    %203 = vmatpush.msra.mxu0 0.0
    %204 = vmatpush.msra.mxu0 0.0
    %205 = vmatpush.msra.mxu0 0.0
    %206 = vmatpush.msra.mxu0 0.0
    %207 = vmatpush.msra.mxu0 0.0
    %208 = vmatpush.msra.mxu0 0.0
    %209 = vmatpush.msra.mxu0 0.0
    %210 = vmatpush.msra.mxu0 0.0
    %211 = vmatpush.msra.mxu0 0.0
    %212 = vmatpush.msra.mxu0 0.0
    %213 = vmatpush.msra.mxu0 0.0
    %214 = vmatpush.msra.mxu0 0.0
    %v215 = vand.u32 %v67, 4294901760
    %v216 = vsub.f32 %v67, %v215
    %v217 = vand.u32 %v216, 4294901760
    %218 = vmatpush.msra.mxu0 %v217
    %v219 = vand.u32 %v66, 4294901760
    %v220 = vsub.f32 %v66, %v219
    %v221 = vand.u32 %v220, 4294901760
    %222 = vmatpush.msra.mxu0 %v221
    %v223 = vand.u32 %v65, 4294901760
    %v224 = vsub.f32 %v65, %v223
    %v225 = vand.u32 %v224, 4294901760
    %226 = vmatpush.msra.mxu0 %v225
    %v227 = vand.u32 %v64, 4294901760
    %v228 = vsub.f32 %v64, %v227
    %v229 = vand.u32 %v228, 4294901760
    %230 = vmatpush.msra.mxu0 %v229
    %v231 = vand.u32 %v74, 4294901760
    %232 = vmatmul.f32.gmra.mxu0 %v231
    %v233 = vpop.f32.mrf.mxu0
    %v234 = vadd.f32 %v201, %v233
    %235 = vdwg.mxu0
    %236 = vmatpush.msra.mxu0 0.0
    %237 = vmatpush.msra.mxu0 0.0
    %238 = vmatpush.msra.mxu0 0.0
    %239 = vmatpush.msra.mxu0 0.0
    %240 = vmatpush.msra.mxu0 0.0
    %241 = vmatpush.msra.mxu0 0.0
    %242 = vmatpush.msra.mxu0 0.0
    %243 = vmatpush.msra.mxu0 0.0
    %244 = vmatpush.msra.mxu0 0.0
    %245 = vmatpush.msra.mxu0 0.0
    %246 = vmatpush.msra.mxu0 0.0
    %247 = vmatpush.msra.mxu0 0.0
    %v248 = vand.u32 %v67, 4294901760
    %249 = vmatpush.msra.mxu0 %v248
    %v250 = vand.u32 %v66, 4294901760
    %251 = vmatpush.msra.mxu0 %v250
    %v252 = vand.u32 %v65, 4294901760
    %253 = vmatpush.msra.mxu0 %v252
    %v254 = vand.u32 %v64, 4294901760
    %255 = vmatpush.msra.mxu0 %v254
    %v256 = vand.u32 %v74, 4294901760
    %257 = vmatmul.f32.gmra.mxu0 %v256
    %v258 = vpop.f32.mrf.mxu0
    %v259 = vadd.f32 %v234, %v258
    %260 = vdwg.mxu0
    %v261 = vmax.f32 %v259, 0.0
    %v262 = vld [vmem:[%s3] sm:$0xff]
    %v263 = vld [vmem:[%s3 + $0x8] sm:$0xff]
    %v264 = vld [vmem:[%s3 + $0x10] sm:$0xff]
    %v265 = vld [vmem:[%s3 + $0x18] sm:$0xff]
    %v266 = vld [vmem:[%s3 + $0x20] sm:$0xff]
    %v267 = vld [vmem:[%s3 + $0x28] sm:$0xff]
    %v268 = vld [vmem:[%s3 + $0x30] sm:$0xff]
    %v269 = vld [vmem:[%s3 + $0x38] sm:$0xff]
    %v270 = vld [vmem:[%s3 + $0x40] sm:$0xff]
    %v271 = vld [vmem:[%s3 + $0x48] sm:$0xff]
    %v272 = vld [vmem:[%s3 + $0x50] sm:$0xff]
    %v273 = vld [vmem:[%s3 + $0x58] sm:$0xff]
    %v274 = vld [vmem:[%s3 + $0x60] sm:$0xff]
    %v275 = vld [vmem:[%s3 + $0x68] sm:$0xff]
    %v276 = vld [vmem:[%s3 + $0x70] sm:$0xff]
    %v277 = vld [vmem:[%s3 + $0x78] sm:$0xff]
    %v278 = vld [vmem:[%s4] sm:$0x1]
    %v280 = vperm.slane %v278, 0
    %v282 = vand.u32 %v277, 4294901760
    %283 = vmatpush.msra.mxu0 %v282
    %v284 = vand.u32 %v276, 4294901760
    %285 = vmatpush.msra.mxu0 %v284
    %v286 = vand.u32 %v275, 4294901760
    %287 = vmatpush.msra.mxu0 %v286
    %v288 = vand.u32 %v274, 4294901760
    %289 = vmatpush.msra.mxu0 %v288
    %v290 = vand.u32 %v273, 4294901760
    %291 = vmatpush.msra.mxu0 %v290
    %v292 = vand.u32 %v272, 4294901760
    %293 = vmatpush.msra.mxu0 %v292
    %v294 = vand.u32 %v271, 4294901760
    %295 = vmatpush.msra.mxu0 %v294
    %v296 = vand.u32 %v270, 4294901760
    %297 = vmatpush.msra.mxu0 %v296
    %v298 = vand.u32 %v269, 4294901760
    %299 = vmatpush.msra.mxu0 %v298
    %v300 = vand.u32 %v268, 4294901760
    %301 = vmatpush.msra.mxu0 %v300
    %v302 = vand.u32 %v267, 4294901760
    %303 = vmatpush.msra.mxu0 %v302
    %v304 = vand.u32 %v266, 4294901760
    %305 = vmatpush.msra.mxu0 %v304
    %v306 = vand.u32 %v265, 4294901760
    %307 = vmatpush.msra.mxu0 %v306
    %v308 = vand.u32 %v264, 4294901760
    %309 = vmatpush.msra.mxu0 %v308
    %v310 = vand.u32 %v263, 4294901760
    %311 = vmatpush.msra.mxu0 %v310
    %v312 = vand.u32 %v262, 4294901760
    %313 = vmatpush.msra.mxu0 %v312
    %v314 = vand.u32 %v261, 4294901760
    %v315 = vsub.f32 %v261, %v314
    %v316 = vand.u32 %v315, 4294901760
    %v317 = vsub.f32 %v315, %v316
    %v318 = vand.u32 %v317, 4294901760
    %319 = vmatmul.f32.gmra.mxu0 %v318
    %v320 = vpop.f32.mrf.mxu0
    %v321 = vadd.f32 %v280, %v320
    %322 = vdwg.mxu0
    %v323 = vand.u32 %v277, 4294901760
    %v324 = vsub.f32 %v277, %v323
    %v325 = vand.u32 %v324, 4294901760
    %v326 = vsub.f32 %v324, %v325
    %v327 = vand.u32 %v326, 4294901760
    %328 = vmatpush.msra.mxu0 %v327
    %v329 = vand.u32 %v276, 4294901760
    %v330 = vsub.f32 %v276, %v329
    %v331 = vand.u32 %v330, 4294901760
    %v332 = vsub.f32 %v330, %v331
    %v333 = vand.u32 %v332, 4294901760
    %334 = vmatpush.msra.mxu0 %v333
    %v335 = vand.u32 %v275, 4294901760
    %v336 = vsub.f32 %v275, %v335
    %v337 = vand.u32 %v336, 4294901760
    %v338 = vsub.f32 %v336, %v337
    %v339 = vand.u32 %v338, 4294901760
    %340 = vmatpush.msra.mxu0 %v339
    %v341 = vand.u32 %v274, 4294901760
    %v342 = vsub.f32 %v274, %v341
    %v343 = vand.u32 %v342, 4294901760
    %v344 = vsub.f32 %v342, %v343
    %v345 = vand.u32 %v344, 4294901760
    %346 = vmatpush.msra.mxu0 %v345
    %v347 = vand.u32 %v273, 4294901760
    %v348 = vsub.f32 %v273, %v347
    %v349 = vand.u32 %v348, 4294901760
    %v350 = vsub.f32 %v348, %v349
    %v351 = vand.u32 %v350, 4294901760
    %352 = vmatpush.msra.mxu0 %v351
    %v353 = vand.u32 %v272, 4294901760
    %v354 = vsub.f32 %v272, %v353
    %v355 = vand.u32 %v354, 4294901760
    %v356 = vsub.f32 %v354, %v355
    %v357 = vand.u32 %v356, 4294901760
    %358 = vmatpush.msra.mxu0 %v357
    %v359 = vand.u32 %v271, 4294901760
    %v360 = vsub.f32 %v271, %v359
    %v361 = vand.u32 %v360, 4294901760
    %v362 = vsub.f32 %v360, %v361
    %v363 = vand.u32 %v362, 4294901760
    %364 = vmatpush.msra.mxu0 %v363
    %v365 = vand.u32 %v270, 4294901760
    %v366 = vsub.f32 %v270, %v365
    %v367 = vand.u32 %v366, 4294901760
    %v368 = vsub.f32 %v366, %v367
    %v369 = vand.u32 %v368, 4294901760
    %370 = vmatpush.msra.mxu0 %v369
    %v371 = vand.u32 %v269, 4294901760
    %v372 = vsub.f32 %v269, %v371
    %v373 = vand.u32 %v372, 4294901760
    %v374 = vsub.f32 %v372, %v373
    %v375 = vand.u32 %v374, 4294901760
    %376 = vmatpush.msra.mxu0 %v375
    %v377 = vand.u32 %v268, 4294901760
    %v378 = vsub.f32 %v268, %v377
    %v379 = vand.u32 %v378, 4294901760
    %v380 = vsub.f32 %v378, %v379
    %v381 = vand.u32 %v380, 4294901760
    %382 = vmatpush.msra.mxu0 %v381
    %v383 = vand.u32 %v267, 4294901760
    %v384 = vsub.f32 %v267, %v383
    %v385 = vand.u32 %v384, 4294901760
    %v386 = vsub.f32 %v384, %v385
    %v387 = vand.u32 %v386, 4294901760
    %388 = vmatpush.msra.mxu0 %v387
    %v389 = vand.u32 %v266, 4294901760
    %v390 = vsub.f32 %v266, %v389
    %v391 = vand.u32 %v390, 4294901760
    %v392 = vsub.f32 %v390, %v391
    %v393 = vand.u32 %v392, 4294901760
    %394 = vmatpush.msra.mxu0 %v393
    %v395 = vand.u32 %v265, 4294901760
    %v396 = vsub.f32 %v265, %v395
    %v397 = vand.u32 %v396, 4294901760
    %v398 = vsub.f32 %v396, %v397
    %v399 = vand.u32 %v398, 4294901760
    %400 = vmatpush.msra.mxu0 %v399
    %v401 = vand.u32 %v264, 4294901760
    %v402 = vsub.f32 %v264, %v401
    %v403 = vand.u32 %v402, 4294901760
    %v404 = vsub.f32 %v402, %v403
    %v405 = vand.u32 %v404, 4294901760
    %406 = vmatpush.msra.mxu0 %v405
    %v407 = vand.u32 %v263, 4294901760
    %v408 = vsub.f32 %v263, %v407
    %v409 = vand.u32 %v408, 4294901760
    %v410 = vsub.f32 %v408, %v409
    %v411 = vand.u32 %v410, 4294901760
    %412 = vmatpush.msra.mxu0 %v411
    %v413 = vand.u32 %v262, 4294901760
    %v414 = vsub.f32 %v262, %v413
    %v415 = vand.u32 %v414, 4294901760
    %v416 = vsub.f32 %v414, %v415
    %v417 = vand.u32 %v416, 4294901760
    %418 = vmatpush.msra.mxu0 %v417
    %v419 = vand.u32 %v261, 4294901760
    %420 = vmatmul.f32.gmra.mxu0 %v419
    %v421 = vpop.f32.mrf.mxu0
    %v422 = vadd.f32 %v321, %v421
    %423 = vdwg.mxu0
    %v424 = vand.u32 %v277, 4294901760
    %v425 = vsub.f32 %v277, %v424
    %426 = vmatpush.msra.mxu0 %v425
    %v427 = vand.u32 %v276, 4294901760
    %v428 = vsub.f32 %v276, %v427
    %429 = vmatpush.msra.mxu0 %v428
    %v430 = vand.u32 %v275, 4294901760
    %v431 = vsub.f32 %v275, %v430
    %432 = vmatpush.msra.mxu0 %v431
    %v433 = vand.u32 %v274, 4294901760
    %v434 = vsub.f32 %v274, %v433
    %435 = vmatpush.msra.mxu0 %v434
    %v436 = vand.u32 %v273, 4294901760
    %v437 = vsub.f32 %v273, %v436
    %438 = vmatpush.msra.mxu0 %v437
    %v439 = vand.u32 %v272, 4294901760
    %v440 = vsub.f32 %v272, %v439
    %441 = vmatpush.msra.mxu0 %v440
    %v442 = vand.u32 %v271, 4294901760
    %v443 = vsub.f32 %v271, %v442
    %444 = vmatpush.msra.mxu0 %v443
    %v445 = vand.u32 %v270, 4294901760
    %v446 = vsub.f32 %v270, %v445
    %447 = vmatpush.msra.mxu0 %v446
    %v448 = vand.u32 %v269, 4294901760
    %v449 = vsub.f32 %v269, %v448
    %450 = vmatpush.msra.mxu0 %v449
    %v451 = vand.u32 %v268, 4294901760
    %v452 = vsub.f32 %v268, %v451
    %453 = vmatpush.msra.mxu0 %v452
    %v454 = vand.u32 %v267, 4294901760
    %v455 = vsub.f32 %v267, %v454
    %456 = vmatpush.msra.mxu0 %v455
    %v457 = vand.u32 %v266, 4294901760
    %v458 = vsub.f32 %v266, %v457
    %459 = vmatpush.msra.mxu0 %v458
    %v460 = vand.u32 %v265, 4294901760
    %v461 = vsub.f32 %v265, %v460
    %462 = vmatpush.msra.mxu0 %v461
    %v463 = vand.u32 %v264, 4294901760
    %v464 = vsub.f32 %v264, %v463
    %465 = vmatpush.msra.mxu0 %v464
    %v466 = vand.u32 %v263, 4294901760
    %v467 = vsub.f32 %v263, %v466
    %468 = vmatpush.msra.mxu0 %v467
    %v469 = vand.u32 %v262, 4294901760
    %v470 = vsub.f32 %v262, %v469
    %471 = vmatpush.msra.mxu0 %v470
    %v472 = vand.u32 %v261, 4294901760
    %v473 = vsub.f32 %v261, %v472
    %474 = vmatmul.f32.gmra.mxu0 %v473
    %v475 = vpop.f32.mrf.mxu0
    %v476 = vadd.f32 %v422, %v475
    %477 = vdwg.mxu0
    %v478 = vand.u32 %v277, 4294901760
    %479 = vmatpush.msra.mxu0 %v478
    %v480 = vand.u32 %v276, 4294901760
    %481 = vmatpush.msra.mxu0 %v480
    %v482 = vand.u32 %v275, 4294901760
    %483 = vmatpush.msra.mxu0 %v482
    %v484 = vand.u32 %v274, 4294901760
    %485 = vmatpush.msra.mxu0 %v484
    %v486 = vand.u32 %v273, 4294901760
    %487 = vmatpush.msra.mxu0 %v486
    %v488 = vand.u32 %v272, 4294901760
    %489 = vmatpush.msra.mxu0 %v488
    %v490 = vand.u32 %v271, 4294901760
    %491 = vmatpush.msra.mxu0 %v490
    %v492 = vand.u32 %v270, 4294901760
    %493 = vmatpush.msra.mxu0 %v492
    %v494 = vand.u32 %v269, 4294901760
    %495 = vmatpush.msra.mxu0 %v494
    %v496 = vand.u32 %v268, 4294901760
    %497 = vmatpush.msra.mxu0 %v496
    %v498 = vand.u32 %v267, 4294901760
    %499 = vmatpush.msra.mxu0 %v498
    %v500 = vand.u32 %v266, 4294901760
    %501 = vmatpush.msra.mxu0 %v500
    %v502 = vand.u32 %v265, 4294901760
    %503 = vmatpush.msra.mxu0 %v502
    %v504 = vand.u32 %v264, 4294901760
    %505 = vmatpush.msra.mxu0 %v504
    %v506 = vand.u32 %v263, 4294901760
    %507 = vmatpush.msra.mxu0 %v506
    %v508 = vand.u32 %v262, 4294901760
    %509 = vmatpush.msra.mxu0 %v508
    %v510 = vand.u32 %v261, 4294901760
    %v511 = vsub.f32 %v261, %v510
    %v512 = vand.u32 %v511, 4294901760
    %513 = vmatmul.f32.gmra.mxu0 %v512
    %v514 = vpop.f32.mrf.mxu0
    %v515 = vadd.f32 %v476, %v514
    %516 = vdwg.mxu0
    %v517 = vand.u32 %v277, 4294901760
    %v518 = vsub.f32 %v277, %v517
    %v519 = vand.u32 %v518, 4294901760
    %520 = vmatpush.msra.mxu0 %v519
    %v521 = vand.u32 %v276, 4294901760
    %v522 = vsub.f32 %v276, %v521
    %v523 = vand.u32 %v522, 4294901760
    %524 = vmatpush.msra.mxu0 %v523
    %v525 = vand.u32 %v275, 4294901760
    %v526 = vsub.f32 %v275, %v525
    %v527 = vand.u32 %v526, 4294901760
    %528 = vmatpush.msra.mxu0 %v527
    %v529 = vand.u32 %v274, 4294901760
    %v530 = vsub.f32 %v274, %v529
    %v531 = vand.u32 %v530, 4294901760
    %532 = vmatpush.msra.mxu0 %v531
    %v533 = vand.u32 %v273, 4294901760
    %v534 = vsub.f32 %v273, %v533
    %v535 = vand.u32 %v534, 4294901760
    %536 = vmatpush.msra.mxu0 %v535
    %v537 = vand.u32 %v272, 4294901760
    %v538 = vsub.f32 %v272, %v537
    %v539 = vand.u32 %v538, 4294901760
    %540 = vmatpush.msra.mxu0 %v539
    %v541 = vand.u32 %v271, 4294901760
    %v542 = vsub.f32 %v271, %v541
    %v543 = vand.u32 %v542, 4294901760
    %544 = vmatpush.msra.mxu0 %v543
    %v545 = vand.u32 %v270, 4294901760
    %v546 = vsub.f32 %v270, %v545
    %v547 = vand.u32 %v546, 4294901760
    %548 = vmatpush.msra.mxu0 %v547
    %v549 = vand.u32 %v269, 4294901760
    %v550 = vsub.f32 %v269, %v549
    %v551 = vand.u32 %v550, 4294901760
    %552 = vmatpush.msra.mxu0 %v551
    %v553 = vand.u32 %v268, 4294901760
    %v554 = vsub.f32 %v268, %v553
    %v555 = vand.u32 %v554, 4294901760
    %556 = vmatpush.msra.mxu0 %v555
    %v557 = vand.u32 %v267, 4294901760
    %v558 = vsub.f32 %v267, %v557
    %v559 = vand.u32 %v558, 4294901760
    %560 = vmatpush.msra.mxu0 %v559
    %v561 = vand.u32 %v266, 4294901760
    %v562 = vsub.f32 %v266, %v561
    %v563 = vand.u32 %v562, 4294901760
    %564 = vmatpush.msra.mxu0 %v563
    %v565 = vand.u32 %v265, 4294901760
    %v566 = vsub.f32 %v265, %v565
    %v567 = vand.u32 %v566, 4294901760
    %568 = vmatpush.msra.mxu0 %v567
    %v569 = vand.u32 %v264, 4294901760
    %v570 = vsub.f32 %v264, %v569
    %v571 = vand.u32 %v570, 4294901760
    %572 = vmatpush.msra.mxu0 %v571
    %v573 = vand.u32 %v263, 4294901760
    %v574 = vsub.f32 %v263, %v573
    %v575 = vand.u32 %v574, 4294901760
    %576 = vmatpush.msra.mxu0 %v575
    %v577 = vand.u32 %v262, 4294901760
    %v578 = vsub.f32 %v262, %v577
    %v579 = vand.u32 %v578, 4294901760
    %580 = vmatpush.msra.mxu0 %v579
    %v581 = vand.u32 %v261, 4294901760
    %582 = vmatmul.f32.gmra.mxu0 %v581
    %v583 = vpop.f32.mrf.mxu0
    %v584 = vadd.f32 %v515, %v583
    %585 = vdwg.mxu0
    %v586 = vand.u32 %v277, 4294901760
    %587 = vmatpush.msra.mxu0 %v586
    %v588 = vand.u32 %v276, 4294901760
    %589 = vmatpush.msra.mxu0 %v588
    %v590 = vand.u32 %v275, 4294901760
    %591 = vmatpush.msra.mxu0 %v590
    %v592 = vand.u32 %v274, 4294901760
    %593 = vmatpush.msra.mxu0 %v592
    %v594 = vand.u32 %v273, 4294901760
    %595 = vmatpush.msra.mxu0 %v594
    %v596 = vand.u32 %v272, 4294901760
    %597 = vmatpush.msra.mxu0 %v596
    %v598 = vand.u32 %v271, 4294901760
    %599 = vmatpush.msra.mxu0 %v598
    %v600 = vand.u32 %v270, 4294901760
    %601 = vmatpush.msra.mxu0 %v600
    %v602 = vand.u32 %v269, 4294901760
    %603 = vmatpush.msra.mxu0 %v602
    %v604 = vand.u32 %v268, 4294901760
    %605 = vmatpush.msra.mxu0 %v604
    %v606 = vand.u32 %v267, 4294901760
    %607 = vmatpush.msra.mxu0 %v606
    %v608 = vand.u32 %v266, 4294901760
    %609 = vmatpush.msra.mxu0 %v608
    %v610 = vand.u32 %v265, 4294901760
    %611 = vmatpush.msra.mxu0 %v610
    %v612 = vand.u32 %v264, 4294901760
    %613 = vmatpush.msra.mxu0 %v612
    %v614 = vand.u32 %v263, 4294901760
    %615 = vmatpush.msra.mxu0 %v614
    %v616 = vand.u32 %v262, 4294901760
    %617 = vmatpush.msra.mxu0 %v616
    %v618 = vand.u32 %v261, 4294901760
    %619 = vmatmul.f32.gmra.mxu0 %v618
    %v620 = vpop.f32.mrf.mxu0
    %v621 = vadd.f32 %v584, %v620
    %622 = vdwg.mxu0
    %v623 = vmax.f32 %v621, 0.0
    %v624 = vld [vmem:[#allocation5] sm:$0xff]
    %v625 = vld [vmem:[#allocation5 + $0x8] sm:$0xff]
    %v626 = vld [vmem:[#allocation5 + $0x10] sm:$0xff]
    %v627 = vld [vmem:[#allocation5 + $0x18] sm:$0xff]
    %v628 = vld [vmem:[#allocation5 + $0x20] sm:$0xff]
    %v629 = vld [vmem:[#allocation5 + $0x28] sm:$0xff]
    %v630 = vld [vmem:[#allocation5 + $0x30] sm:$0xff]
    %v631 = vld [vmem:[#allocation5 + $0x38] sm:$0xff]
    %v632 = vld [vmem:[#allocation5 + $0x40] sm:$0xff]
    %v633 = vld [vmem:[#allocation5 + $0x48] sm:$0xff]
    %v634 = vld [vmem:[#allocation5 + $0x50] sm:$0xff]
    %v635 = vld [vmem:[#allocation5 + $0x58] sm:$0xff]
    %v636 = vld [vmem:[#allocation5 + $0x60] sm:$0xff]
    %v637 = vld [vmem:[#allocation5 + $0x68] sm:$0xff]
    %v638 = vld [vmem:[#allocation5 + $0x70] sm:$0xff]
    %v639 = vld [vmem:[#allocation5 + $0x78] sm:$0xff]
    %v640 = vld [vmem:[%s6] sm:$0x1]
    %v642 = vperm.slane %v640, 0
    %v644 = vand.u32 %v639, 4294901760
    %645 = vmatpush.msra.mxu0 %v644
    %v646 = vand.u32 %v638, 4294901760
    %647 = vmatpush.msra.mxu0 %v646
    %v648 = vand.u32 %v637, 4294901760
    %649 = vmatpush.msra.mxu0 %v648
    %v650 = vand.u32 %v636, 4294901760
    %651 = vmatpush.msra.mxu0 %v650
    %v652 = vand.u32 %v635, 4294901760
    %653 = vmatpush.msra.mxu0 %v652
    %v654 = vand.u32 %v634, 4294901760
    %655 = vmatpush.msra.mxu0 %v654
    %v656 = vand.u32 %v633, 4294901760
    %657 = vmatpush.msra.mxu0 %v656
    %v658 = vand.u32 %v632, 4294901760
    %659 = vmatpush.msra.mxu0 %v658
    %v660 = vand.u32 %v631, 4294901760
    %661 = vmatpush.msra.mxu0 %v660
    %v662 = vand.u32 %v630, 4294901760
    %663 = vmatpush.msra.mxu0 %v662
    %v664 = vand.u32 %v629, 4294901760
    %665 = vmatpush.msra.mxu0 %v664
    %v666 = vand.u32 %v628, 4294901760
    %667 = vmatpush.msra.mxu0 %v666
    %v668 = vand.u32 %v627, 4294901760
    %669 = vmatpush.msra.mxu0 %v668
    %v670 = vand.u32 %v626, 4294901760
    %671 = vmatpush.msra.mxu0 %v670
    %v672 = vand.u32 %v625, 4294901760
    %673 = vmatpush.msra.mxu0 %v672
    %v674 = vand.u32 %v624, 4294901760
    %675 = vmatpush.msra.mxu0 %v674
    %v676 = vand.u32 %v623, 4294901760
    %v677 = vsub.f32 %v623, %v676
    %v678 = vand.u32 %v677, 4294901760
    %v679 = vsub.f32 %v677, %v678
    %v680 = vand.u32 %v679, 4294901760
    %681 = vmatmul.f32.gmra.mxu0 %v680
    %v682 = vpop.f32.mrf.mxu0
    %v683 = vadd.f32 %v642, %v682
    %684 = vdwg.mxu0
    %v685 = vand.u32 %v639, 4294901760
    %v686 = vsub.f32 %v639, %v685
    %v687 = vand.u32 %v686, 4294901760
    %v688 = vsub.f32 %v686, %v687
    %v689 = vand.u32 %v688, 4294901760
    %690 = vmatpush.msra.mxu0 %v689
    %v691 = vand.u32 %v638, 4294901760
    %v692 = vsub.f32 %v638, %v691
    %v693 = vand.u32 %v692, 4294901760
    %v694 = vsub.f32 %v692, %v693
    %v695 = vand.u32 %v694, 4294901760
    %696 = vmatpush.msra.mxu0 %v695
    %v697 = vand.u32 %v637, 4294901760
    %v698 = vsub.f32 %v637, %v697
    %v699 = vand.u32 %v698, 4294901760
    %v700 = vsub.f32 %v698, %v699
    %v701 = vand.u32 %v700, 4294901760
    %702 = vmatpush.msra.mxu0 %v701
    %v703 = vand.u32 %v636, 4294901760
    %v704 = vsub.f32 %v636, %v703
    %v705 = vand.u32 %v704, 4294901760
    %v706 = vsub.f32 %v704, %v705
    %v707 = vand.u32 %v706, 4294901760
    %708 = vmatpush.msra.mxu0 %v707
    %v709 = vand.u32 %v635, 4294901760
    %v710 = vsub.f32 %v635, %v709
    %v711 = vand.u32 %v710, 4294901760
    %v712 = vsub.f32 %v710, %v711
    %v713 = vand.u32 %v712, 4294901760
    %714 = vmatpush.msra.mxu0 %v713
    %v715 = vand.u32 %v634, 4294901760
    %v716 = vsub.f32 %v634, %v715
    %v717 = vand.u32 %v716, 4294901760
    %v718 = vsub.f32 %v716, %v717
    %v719 = vand.u32 %v718, 4294901760
    %720 = vmatpush.msra.mxu0 %v719
    %v721 = vand.u32 %v633, 4294901760
    %v722 = vsub.f32 %v633, %v721
    %v723 = vand.u32 %v722, 4294901760
    %v724 = vsub.f32 %v722, %v723
    %v725 = vand.u32 %v724, 4294901760
    %726 = vmatpush.msra.mxu0 %v725
    %v727 = vand.u32 %v632, 4294901760
    %v728 = vsub.f32 %v632, %v727
    %v729 = vand.u32 %v728, 4294901760
    %v730 = vsub.f32 %v728, %v729
    %v731 = vand.u32 %v730, 4294901760
    %732 = vmatpush.msra.mxu0 %v731
    %v733 = vand.u32 %v631, 4294901760
    %v734 = vsub.f32 %v631, %v733
    %v735 = vand.u32 %v734, 4294901760
    %v736 = vsub.f32 %v734, %v735
    %v737 = vand.u32 %v736, 4294901760
    %738 = vmatpush.msra.mxu0 %v737
    %v739 = vand.u32 %v630, 4294901760
    %v740 = vsub.f32 %v630, %v739
    %v741 = vand.u32 %v740, 4294901760
    %v742 = vsub.f32 %v740, %v741
    %v743 = vand.u32 %v742, 4294901760
    %744 = vmatpush.msra.mxu0 %v743
    %v745 = vand.u32 %v629, 4294901760
    %v746 = vsub.f32 %v629, %v745
    %v747 = vand.u32 %v746, 4294901760
    %v748 = vsub.f32 %v746, %v747
    %v749 = vand.u32 %v748, 4294901760
    %750 = vmatpush.msra.mxu0 %v749
    %v751 = vand.u32 %v628, 4294901760
    %v752 = vsub.f32 %v628, %v751
    %v753 = vand.u32 %v752, 4294901760
    %v754 = vsub.f32 %v752, %v753
    %v755 = vand.u32 %v754, 4294901760
    %756 = vmatpush.msra.mxu0 %v755
    %v757 = vand.u32 %v627, 4294901760
    %v758 = vsub.f32 %v627, %v757
    %v759 = vand.u32 %v758, 4294901760
    %v760 = vsub.f32 %v758, %v759
    %v761 = vand.u32 %v760, 4294901760
    %762 = vmatpush.msra.mxu0 %v761
    %v763 = vand.u32 %v626, 4294901760
    %v764 = vsub.f32 %v626, %v763
    %v765 = vand.u32 %v764, 4294901760
    %v766 = vsub.f32 %v764, %v765
    %v767 = vand.u32 %v766, 4294901760
    %768 = vmatpush.msra.mxu0 %v767
    %v769 = vand.u32 %v625, 4294901760
    %v770 = vsub.f32 %v625, %v769
    %v771 = vand.u32 %v770, 4294901760
    %v772 = vsub.f32 %v770, %v771
    %v773 = vand.u32 %v772, 4294901760
    %774 = vmatpush.msra.mxu0 %v773
    %v775 = vand.u32 %v624, 4294901760
    %v776 = vsub.f32 %v624, %v775
    %v777 = vand.u32 %v776, 4294901760
    %v778 = vsub.f32 %v776, %v777
    %v779 = vand.u32 %v778, 4294901760
    %780 = vmatpush.msra.mxu0 %v779
    %v781 = vand.u32 %v623, 4294901760
    %782 = vmatmul.f32.gmra.mxu0 %v781
    %v783 = vpop.f32.mrf.mxu0
    %v784 = vadd.f32 %v683, %v783
    %785 = vdwg.mxu0
    %v786 = vand.u32 %v639, 4294901760
    %v787 = vsub.f32 %v639, %v786
    %788 = vmatpush.msra.mxu0 %v787
    %v789 = vand.u32 %v638, 4294901760
    %v790 = vsub.f32 %v638, %v789
    %791 = vmatpush.msra.mxu0 %v790
    %v792 = vand.u32 %v637, 4294901760
    %v793 = vsub.f32 %v637, %v792
    %794 = vmatpush.msra.mxu0 %v793
    %v795 = vand.u32 %v636, 4294901760
    %v796 = vsub.f32 %v636, %v795
    %797 = vmatpush.msra.mxu0 %v796
    %v798 = vand.u32 %v635, 4294901760
    %v799 = vsub.f32 %v635, %v798
    %800 = vmatpush.msra.mxu0 %v799
    %v801 = vand.u32 %v634, 4294901760
    %v802 = vsub.f32 %v634, %v801
    %803 = vmatpush.msra.mxu0 %v802
    %v804 = vand.u32 %v633, 4294901760
    %v805 = vsub.f32 %v633, %v804
    %806 = vmatpush.msra.mxu0 %v805
    %v807 = vand.u32 %v632, 4294901760
    %v808 = vsub.f32 %v632, %v807
    %809 = vmatpush.msra.mxu0 %v808
    %v810 = vand.u32 %v631, 4294901760
    %v811 = vsub.f32 %v631, %v810
    %812 = vmatpush.msra.mxu0 %v811
    %v813 = vand.u32 %v630, 4294901760
    %v814 = vsub.f32 %v630, %v813
    %815 = vmatpush.msra.mxu0 %v814
    %v816 = vand.u32 %v629, 4294901760
    %v817 = vsub.f32 %v629, %v816
    %818 = vmatpush.msra.mxu0 %v817
    %v819 = vand.u32 %v628, 4294901760
    %v820 = vsub.f32 %v628, %v819
    %821 = vmatpush.msra.mxu0 %v820
    %v822 = vand.u32 %v627, 4294901760
    %v823 = vsub.f32 %v627, %v822
    %824 = vmatpush.msra.mxu0 %v823
    %v825 = vand.u32 %v626, 4294901760
    %v826 = vsub.f32 %v626, %v825
    %827 = vmatpush.msra.mxu0 %v826
    %v828 = vand.u32 %v625, 4294901760
    %v829 = vsub.f32 %v625, %v828
    %830 = vmatpush.msra.mxu0 %v829
    %v831 = vand.u32 %v624, 4294901760
    %v832 = vsub.f32 %v624, %v831
    %833 = vmatpush.msra.mxu0 %v832
    %v834 = vand.u32 %v623, 4294901760
    %v835 = vsub.f32 %v623, %v834
    %836 = vmatmul.f32.gmra.mxu0 %v835
    %v837 = vpop.f32.mrf.mxu0
    %v838 = vadd.f32 %v784, %v837
    %839 = vdwg.mxu0
    %v840 = vand.u32 %v639, 4294901760
    %841 = vmatpush.msra.mxu0 %v840
    %v842 = vand.u32 %v638, 4294901760
    %843 = vmatpush.msra.mxu0 %v842
    %v844 = vand.u32 %v637, 4294901760
    %845 = vmatpush.msra.mxu0 %v844
    %v846 = vand.u32 %v636, 4294901760
    %847 = vmatpush.msra.mxu0 %v846
    %v848 = vand.u32 %v635, 4294901760
    %849 = vmatpush.msra.mxu0 %v848
    %v850 = vand.u32 %v634, 4294901760
    %851 = vmatpush.msra.mxu0 %v850
    %v852 = vand.u32 %v633, 4294901760
    %853 = vmatpush.msra.mxu0 %v852
    %v854 = vand.u32 %v632, 4294901760
    %855 = vmatpush.msra.mxu0 %v854
    %v856 = vand.u32 %v631, 4294901760
    %857 = vmatpush.msra.mxu0 %v856
    %v858 = vand.u32 %v630, 4294901760
    %859 = vmatpush.msra.mxu0 %v858
    %v860 = vand.u32 %v629, 4294901760
    %861 = vmatpush.msra.mxu0 %v860
    %v862 = vand.u32 %v628, 4294901760
    %863 = vmatpush.msra.mxu0 %v862
    %v864 = vand.u32 %v627, 4294901760
    %865 = vmatpush.msra.mxu0 %v864
    %v866 = vand.u32 %v626, 4294901760
    %867 = vmatpush.msra.mxu0 %v866
    %v868 = vand.u32 %v625, 4294901760
    %869 = vmatpush.msra.mxu0 %v868
    %v870 = vand.u32 %v624, 4294901760
    %871 = vmatpush.msra.mxu0 %v870
    %v872 = vand.u32 %v623, 4294901760
    %v873 = vsub.f32 %v623, %v872
    %v874 = vand.u32 %v873, 4294901760
    %875 = vmatmul.f32.gmra.mxu0 %v874
    %v876 = vpop.f32.mrf.mxu0
    %v877 = vadd.f32 %v838, %v876
    %878 = vdwg.mxu0
    %v879 = vand.u32 %v639, 4294901760
    %v880 = vsub.f32 %v639, %v879
    %v881 = vand.u32 %v880, 4294901760
    %882 = vmatpush.msra.mxu0 %v881
    %v883 = vand.u32 %v638, 4294901760
    %v884 = vsub.f32 %v638, %v883
    %v885 = vand.u32 %v884, 4294901760
    %886 = vmatpush.msra.mxu0 %v885
    %v887 = vand.u32 %v637, 4294901760
    %v888 = vsub.f32 %v637, %v887
    %v889 = vand.u32 %v888, 4294901760
    %890 = vmatpush.msra.mxu0 %v889
    %v891 = vand.u32 %v636, 4294901760
    %v892 = vsub.f32 %v636, %v891
    %v893 = vand.u32 %v892, 4294901760
    %894 = vmatpush.msra.mxu0 %v893
    %v895 = vand.u32 %v635, 4294901760
    %v896 = vsub.f32 %v635, %v895
    %v897 = vand.u32 %v896, 4294901760
    %898 = vmatpush.msra.mxu0 %v897
    %v899 = vand.u32 %v634, 4294901760
    %v900 = vsub.f32 %v634, %v899
    %v901 = vand.u32 %v900, 4294901760
    %902 = vmatpush.msra.mxu0 %v901
    %v903 = vand.u32 %v633, 4294901760
    %v904 = vsub.f32 %v633, %v903
    %v905 = vand.u32 %v904, 4294901760
    %906 = vmatpush.msra.mxu0 %v905
    %v907 = vand.u32 %v632, 4294901760
    %v908 = vsub.f32 %v632, %v907
    %v909 = vand.u32 %v908, 4294901760
    %910 = vmatpush.msra.mxu0 %v909
    %v911 = vand.u32 %v631, 4294901760
    %v912 = vsub.f32 %v631, %v911
    %v913 = vand.u32 %v912, 4294901760
    %914 = vmatpush.msra.mxu0 %v913
    %v915 = vand.u32 %v630, 4294901760
    %v916 = vsub.f32 %v630, %v915
    %v917 = vand.u32 %v916, 4294901760
    %918 = vmatpush.msra.mxu0 %v917
    %v919 = vand.u32 %v629, 4294901760
    %v920 = vsub.f32 %v629, %v919
    %v921 = vand.u32 %v920, 4294901760
    %922 = vmatpush.msra.mxu0 %v921
    %v923 = vand.u32 %v628, 4294901760
    %v924 = vsub.f32 %v628, %v923
    %v925 = vand.u32 %v924, 4294901760
    %926 = vmatpush.msra.mxu0 %v925
    %v927 = vand.u32 %v627, 4294901760
    %v928 = vsub.f32 %v627, %v927
    %v929 = vand.u32 %v928, 4294901760
    %930 = vmatpush.msra.mxu0 %v929
    %v931 = vand.u32 %v626, 4294901760
    %v932 = vsub.f32 %v626, %v931
    %v933 = vand.u32 %v932, 4294901760
    %934 = vmatpush.msra.mxu0 %v933
    %v935 = vand.u32 %v625, 4294901760
    %v936 = vsub.f32 %v625, %v935
    %v937 = vand.u32 %v936, 4294901760
    %938 = vmatpush.msra.mxu0 %v937
    %v939 = vand.u32 %v624, 4294901760
    %v940 = vsub.f32 %v624, %v939
    %v941 = vand.u32 %v940, 4294901760
    %942 = vmatpush.msra.mxu0 %v941
    %v943 = vand.u32 %v623, 4294901760
    %944 = vmatmul.f32.gmra.mxu0 %v943
    %v945 = vpop.f32.mrf.mxu0
    %v946 = vadd.f32 %v877, %v945
    %947 = vdwg.mxu0
    %v948 = vand.u32 %v639, 4294901760
    %949 = vmatpush.msra.mxu0 %v948
    %v950 = vand.u32 %v638, 4294901760
    %951 = vmatpush.msra.mxu0 %v950
    %v952 = vand.u32 %v637, 4294901760
    %953 = vmatpush.msra.mxu0 %v952
    %v954 = vand.u32 %v636, 4294901760
    %955 = vmatpush.msra.mxu0 %v954
    %v956 = vand.u32 %v635, 4294901760
    %957 = vmatpush.msra.mxu0 %v956
    %v958 = vand.u32 %v634, 4294901760
    %959 = vmatpush.msra.mxu0 %v958
    %v960 = vand.u32 %v633, 4294901760
    %961 = vmatpush.msra.mxu0 %v960
    %v962 = vand.u32 %v632, 4294901760
    %963 = vmatpush.msra.mxu0 %v962
    %v964 = vand.u32 %v631, 4294901760
    %965 = vmatpush.msra.mxu0 %v964
    %v966 = vand.u32 %v630, 4294901760
    %967 = vmatpush.msra.mxu0 %v966
    %v968 = vand.u32 %v629, 4294901760
    %969 = vmatpush.msra.mxu0 %v968
    %v970 = vand.u32 %v628, 4294901760
    %971 = vmatpush.msra.mxu0 %v970
    %v972 = vand.u32 %v627, 4294901760
    %973 = vmatpush.msra.mxu0 %v972
    %v974 = vand.u32 %v626, 4294901760
    %975 = vmatpush.msra.mxu0 %v974
    %v976 = vand.u32 %v625, 4294901760
    %977 = vmatpush.msra.mxu0 %v976
    %v978 = vand.u32 %v624, 4294901760
    %979 = vmatpush.msra.mxu0 %v978
    %v980 = vand.u32 %v623, 4294901760
    %981 = vmatmul.f32.gmra.mxu0 %v980
    %v982 = vpop.f32.mrf.mxu0
    %v983 = vadd.f32 %v946, %v982
    %984 = vdwg.mxu0
    %v985 = vmax.f32 %v983, 0.0
    %v986 = vld [vmem:[%s7] sm:$0xff]
    %v987 = vld [vmem:[%s7 + $0x8] sm:$0xff]
    %v988 = vld [vmem:[%s7 + $0x10] sm:$0xff]
    %v989 = vld [vmem:[%s7 + $0x18] sm:$0xff]
    %v990 = vld [vmem:[%s7 + $0x20] sm:$0xff]
    %v991 = vld [vmem:[%s7 + $0x28] sm:$0xff]
    %v992 = vld [vmem:[%s7 + $0x30] sm:$0xff]
    %v993 = vld [vmem:[%s7 + $0x38] sm:$0xff]
    %v994 = vld [vmem:[%s7 + $0x40] sm:$0xff]
    %v995 = vld [vmem:[%s7 + $0x48] sm:$0xff]
    %v996 = vld [vmem:[%s7 + $0x50] sm:$0xff]
    %v997 = vld [vmem:[%s7 + $0x58] sm:$0xff]
    %v998 = vld [vmem:[%s7 + $0x60] sm:$0xff]
    %v999 = vld [vmem:[%s7 + $0x68] sm:$0xff]
    %v1000 = vld [vmem:[%s7 + $0x70] sm:$0xff]
    %v1001 = vld [vmem:[%s7 + $0x78] sm:$0xff]
    %v1002 = vld [vmem:[%s8] sm:$0x1]
    %v1004 = vperm.slane %v1002, 0
    %v1006 = vand.u32 %v1001, 4294901760
    %1007 = vmatpush.msra.mxu0 %v1006
    %v1008 = vand.u32 %v1000, 4294901760
    %1009 = vmatpush.msra.mxu0 %v1008
    %v1010 = vand.u32 %v999, 4294901760
    %1011 = vmatpush.msra.mxu0 %v1010
    %v1012 = vand.u32 %v998, 4294901760
    %1013 = vmatpush.msra.mxu0 %v1012
    %v1014 = vand.u32 %v997, 4294901760
    %1015 = vmatpush.msra.mxu0 %v1014
    %v1016 = vand.u32 %v996, 4294901760
    %1017 = vmatpush.msra.mxu0 %v1016
    %v1018 = vand.u32 %v995, 4294901760
    %1019 = vmatpush.msra.mxu0 %v1018
    %v1020 = vand.u32 %v994, 4294901760
    %1021 = vmatpush.msra.mxu0 %v1020
    %v1022 = vand.u32 %v993, 4294901760
    %1023 = vmatpush.msra.mxu0 %v1022
    %v1024 = vand.u32 %v992, 4294901760
    %1025 = vmatpush.msra.mxu0 %v1024
    %v1026 = vand.u32 %v991, 4294901760
    %1027 = vmatpush.msra.mxu0 %v1026
    %v1028 = vand.u32 %v990, 4294901760
    %1029 = vmatpush.msra.mxu0 %v1028
    %v1030 = vand.u32 %v989, 4294901760
    %1031 = vmatpush.msra.mxu0 %v1030
    %v1032 = vand.u32 %v988, 4294901760
    %1033 = vmatpush.msra.mxu0 %v1032
    %v1034 = vand.u32 %v987, 4294901760
    %1035 = vmatpush.msra.mxu0 %v1034
    %v1036 = vand.u32 %v986, 4294901760
    %1037 = vmatpush.msra.mxu0 %v1036
    %v1038 = vand.u32 %v985, 4294901760
    %v1039 = vsub.f32 %v985, %v1038
    %v1040 = vand.u32 %v1039, 4294901760
    %v1041 = vsub.f32 %v1039, %v1040
    %v1042 = vand.u32 %v1041, 4294901760
    %1043 = vmatmul.f32.gmra.mxu0 %v1042
    %v1044 = vpop.f32.mrf.mxu0
    %v1045 = vadd.f32 %v1004, %v1044
    %1046 = vdwg.mxu0
    %v1047 = vand.u32 %v1001, 4294901760
    %v1048 = vsub.f32 %v1001, %v1047
    %v1049 = vand.u32 %v1048, 4294901760
    %v1050 = vsub.f32 %v1048, %v1049
    %v1051 = vand.u32 %v1050, 4294901760
    %1052 = vmatpush.msra.mxu0 %v1051
    %v1053 = vand.u32 %v1000, 4294901760
    %v1054 = vsub.f32 %v1000, %v1053
    %v1055 = vand.u32 %v1054, 4294901760
    %v1056 = vsub.f32 %v1054, %v1055
    %v1057 = vand.u32 %v1056, 4294901760
    %1058 = vmatpush.msra.mxu0 %v1057
    %v1059 = vand.u32 %v999, 4294901760
    %v1060 = vsub.f32 %v999, %v1059
    %v1061 = vand.u32 %v1060, 4294901760
    %v1062 = vsub.f32 %v1060, %v1061
    %v1063 = vand.u32 %v1062, 4294901760
    %1064 = vmatpush.msra.mxu0 %v1063
    %v1065 = vand.u32 %v998, 4294901760
    %v1066 = vsub.f32 %v998, %v1065
    %v1067 = vand.u32 %v1066, 4294901760
    %v1068 = vsub.f32 %v1066, %v1067
    %v1069 = vand.u32 %v1068, 4294901760
    %1070 = vmatpush.msra.mxu0 %v1069
    %v1071 = vand.u32 %v997, 4294901760
    %v1072 = vsub.f32 %v997, %v1071
    %v1073 = vand.u32 %v1072, 4294901760
    %v1074 = vsub.f32 %v1072, %v1073
    %v1075 = vand.u32 %v1074, 4294901760
    %1076 = vmatpush.msra.mxu0 %v1075
    %v1077 = vand.u32 %v996, 4294901760
    %v1078 = vsub.f32 %v996, %v1077
    %v1079 = vand.u32 %v1078, 4294901760
    %v1080 = vsub.f32 %v1078, %v1079
    %v1081 = vand.u32 %v1080, 4294901760
    %1082 = vmatpush.msra.mxu0 %v1081
    %v1083 = vand.u32 %v995, 4294901760
    %v1084 = vsub.f32 %v995, %v1083
    %v1085 = vand.u32 %v1084, 4294901760
    %v1086 = vsub.f32 %v1084, %v1085
    %v1087 = vand.u32 %v1086, 4294901760
    %1088 = vmatpush.msra.mxu0 %v1087
    %v1089 = vand.u32 %v994, 4294901760
    %v1090 = vsub.f32 %v994, %v1089
    %v1091 = vand.u32 %v1090, 4294901760
    %v1092 = vsub.f32 %v1090, %v1091
    %v1093 = vand.u32 %v1092, 4294901760
    %1094 = vmatpush.msra.mxu0 %v1093
    %v1095 = vand.u32 %v993, 4294901760
    %v1096 = vsub.f32 %v993, %v1095
    %v1097 = vand.u32 %v1096, 4294901760
    %v1098 = vsub.f32 %v1096, %v1097
    %v1099 = vand.u32 %v1098, 4294901760
    %1100 = vmatpush.msra.mxu0 %v1099
    %v1101 = vand.u32 %v992, 4294901760
    %v1102 = vsub.f32 %v992, %v1101
    %v1103 = vand.u32 %v1102, 4294901760
    %v1104 = vsub.f32 %v1102, %v1103
    %v1105 = vand.u32 %v1104, 4294901760
    %1106 = vmatpush.msra.mxu0 %v1105
    %v1107 = vand.u32 %v991, 4294901760
    %v1108 = vsub.f32 %v991, %v1107
    %v1109 = vand.u32 %v1108, 4294901760
    %v1110 = vsub.f32 %v1108, %v1109
    %v1111 = vand.u32 %v1110, 4294901760
    %1112 = vmatpush.msra.mxu0 %v1111
    %v1113 = vand.u32 %v990, 4294901760
    %v1114 = vsub.f32 %v990, %v1113
    %v1115 = vand.u32 %v1114, 4294901760
    %v1116 = vsub.f32 %v1114, %v1115
    %v1117 = vand.u32 %v1116, 4294901760
    %1118 = vmatpush.msra.mxu0 %v1117
    %v1119 = vand.u32 %v989, 4294901760
    %v1120 = vsub.f32 %v989, %v1119
    %v1121 = vand.u32 %v1120, 4294901760
    %v1122 = vsub.f32 %v1120, %v1121
    %v1123 = vand.u32 %v1122, 4294901760
    %1124 = vmatpush.msra.mxu0 %v1123
    %v1125 = vand.u32 %v988, 4294901760
    %v1126 = vsub.f32 %v988, %v1125
    %v1127 = vand.u32 %v1126, 4294901760
    %v1128 = vsub.f32 %v1126, %v1127
    %v1129 = vand.u32 %v1128, 4294901760
    %1130 = vmatpush.msra.mxu0 %v1129
    %v1131 = vand.u32 %v987, 4294901760
    %v1132 = vsub.f32 %v987, %v1131
    %v1133 = vand.u32 %v1132, 4294901760
    %v1134 = vsub.f32 %v1132, %v1133
    %v1135 = vand.u32 %v1134, 4294901760
    %1136 = vmatpush.msra.mxu0 %v1135
    %v1137 = vand.u32 %v986, 4294901760
    %v1138 = vsub.f32 %v986, %v1137
    %v1139 = vand.u32 %v1138, 4294901760
    %v1140 = vsub.f32 %v1138, %v1139
    %v1141 = vand.u32 %v1140, 4294901760
    %1142 = vmatpush.msra.mxu0 %v1141
    %v1143 = vand.u32 %v985, 4294901760
    %1144 = vmatmul.f32.gmra.mxu0 %v1143
    %v1145 = vpop.f32.mrf.mxu0
    %v1146 = vadd.f32 %v1045, %v1145
    %1147 = vdwg.mxu0
    %v1148 = vand.u32 %v1001, 4294901760
    %v1149 = vsub.f32 %v1001, %v1148
    %1150 = vmatpush.msra.mxu0 %v1149
    %v1151 = vand.u32 %v1000, 4294901760
    %v1152 = vsub.f32 %v1000, %v1151
    %1153 = vmatpush.msra.mxu0 %v1152
    %v1154 = vand.u32 %v999, 4294901760
    %v1155 = vsub.f32 %v999, %v1154
    %1156 = vmatpush.msra.mxu0 %v1155
    %v1157 = vand.u32 %v998, 4294901760
    %v1158 = vsub.f32 %v998, %v1157
    %1159 = vmatpush.msra.mxu0 %v1158
    %v1160 = vand.u32 %v997, 4294901760
    %v1161 = vsub.f32 %v997, %v1160
    %1162 = vmatpush.msra.mxu0 %v1161
    %v1163 = vand.u32 %v996, 4294901760
    %v1164 = vsub.f32 %v996, %v1163
    %1165 = vmatpush.msra.mxu0 %v1164
    %v1166 = vand.u32 %v995, 4294901760
    %v1167 = vsub.f32 %v995, %v1166
    %1168 = vmatpush.msra.mxu0 %v1167
    %v1169 = vand.u32 %v994, 4294901760
    %v1170 = vsub.f32 %v994, %v1169
    %1171 = vmatpush.msra.mxu0 %v1170
    %v1172 = vand.u32 %v993, 4294901760
    %v1173 = vsub.f32 %v993, %v1172
    %1174 = vmatpush.msra.mxu0 %v1173
    %v1175 = vand.u32 %v992, 4294901760
    %v1176 = vsub.f32 %v992, %v1175
    %1177 = vmatpush.msra.mxu0 %v1176
    %v1178 = vand.u32 %v991, 4294901760
    %v1179 = vsub.f32 %v991, %v1178
    %1180 = vmatpush.msra.mxu0 %v1179
    %v1181 = vand.u32 %v990, 4294901760
    %v1182 = vsub.f32 %v990, %v1181
    %1183 = vmatpush.msra.mxu0 %v1182
    %v1184 = vand.u32 %v989, 4294901760
    %v1185 = vsub.f32 %v989, %v1184
    %1186 = vmatpush.msra.mxu0 %v1185
    %v1187 = vand.u32 %v988, 4294901760
    %v1188 = vsub.f32 %v988, %v1187
    %1189 = vmatpush.msra.mxu0 %v1188
    %v1190 = vand.u32 %v987, 4294901760
    %v1191 = vsub.f32 %v987, %v1190
    %1192 = vmatpush.msra.mxu0 %v1191
    %v1193 = vand.u32 %v986, 4294901760
    %v1194 = vsub.f32 %v986, %v1193
    %1195 = vmatpush.msra.mxu0 %v1194
    %v1196 = vand.u32 %v985, 4294901760
    %v1197 = vsub.f32 %v985, %v1196
    %1198 = vmatmul.f32.gmra.mxu0 %v1197
    %v1199 = vpop.f32.mrf.mxu0
    %v1200 = vadd.f32 %v1146, %v1199
    %1201 = vdwg.mxu0
    %v1202 = vand.u32 %v1001, 4294901760
    %1203 = vmatpush.msra.mxu0 %v1202
    %v1204 = vand.u32 %v1000, 4294901760
    %1205 = vmatpush.msra.mxu0 %v1204
    %v1206 = vand.u32 %v999, 4294901760
    %1207 = vmatpush.msra.mxu0 %v1206
    %v1208 = vand.u32 %v998, 4294901760
    %1209 = vmatpush.msra.mxu0 %v1208
    %v1210 = vand.u32 %v997, 4294901760
    %1211 = vmatpush.msra.mxu0 %v1210
    %v1212 = vand.u32 %v996, 4294901760
    %1213 = vmatpush.msra.mxu0 %v1212
    %v1214 = vand.u32 %v995, 4294901760
    %1215 = vmatpush.msra.mxu0 %v1214
    %v1216 = vand.u32 %v994, 4294901760
    %1217 = vmatpush.msra.mxu0 %v1216
    %v1218 = vand.u32 %v993, 4294901760
    %1219 = vmatpush.msra.mxu0 %v1218
    %v1220 = vand.u32 %v992, 4294901760
    %1221 = vmatpush.msra.mxu0 %v1220
    %v1222 = vand.u32 %v991, 4294901760
    %1223 = vmatpush.msra.mxu0 %v1222
    %v1224 = vand.u32 %v990, 4294901760
    %1225 = vmatpush.msra.mxu0 %v1224
    %v1226 = vand.u32 %v989, 4294901760
    %1227 = vmatpush.msra.mxu0 %v1226
    %v1228 = vand.u32 %v988, 4294901760
    %1229 = vmatpush.msra.mxu0 %v1228
    %v1230 = vand.u32 %v987, 4294901760
    %1231 = vmatpush.msra.mxu0 %v1230
    %v1232 = vand.u32 %v986, 4294901760
    %1233 = vmatpush.msra.mxu0 %v1232
    %v1234 = vand.u32 %v985, 4294901760
    %v1235 = vsub.f32 %v985, %v1234
    %v1236 = vand.u32 %v1235, 4294901760
    %1237 = vmatmul.f32.gmra.mxu0 %v1236
    %v1238 = vpop.f32.mrf.mxu0
    %v1239 = vadd.f32 %v1200, %v1238
    %1240 = vdwg.mxu0
    %v1241 = vand.u32 %v1001, 4294901760
    %v1242 = vsub.f32 %v1001, %v1241
    %v1243 = vand.u32 %v1242, 4294901760
    %1244 = vmatpush.msra.mxu0 %v1243
    %v1245 = vand.u32 %v1000, 4294901760
    %v1246 = vsub.f32 %v1000, %v1245
    %v1247 = vand.u32 %v1246, 4294901760
    %1248 = vmatpush.msra.mxu0 %v1247
    %v1249 = vand.u32 %v999, 4294901760
    %v1250 = vsub.f32 %v999, %v1249
    %v1251 = vand.u32 %v1250, 4294901760
    %1252 = vmatpush.msra.mxu0 %v1251
    %v1253 = vand.u32 %v998, 4294901760
    %v1254 = vsub.f32 %v998, %v1253
    %v1255 = vand.u32 %v1254, 4294901760
    %1256 = vmatpush.msra.mxu0 %v1255
    %v1257 = vand.u32 %v997, 4294901760
    %v1258 = vsub.f32 %v997, %v1257
    %v1259 = vand.u32 %v1258, 4294901760
    %1260 = vmatpush.msra.mxu0 %v1259
    %v1261 = vand.u32 %v996, 4294901760
    %v1262 = vsub.f32 %v996, %v1261
    %v1263 = vand.u32 %v1262, 4294901760
    %1264 = vmatpush.msra.mxu0 %v1263
    %v1265 = vand.u32 %v995, 4294901760
    %v1266 = vsub.f32 %v995, %v1265
    %v1267 = vand.u32 %v1266, 4294901760
    %1268 = vmatpush.msra.mxu0 %v1267
    %v1269 = vand.u32 %v994, 4294901760
    %v1270 = vsub.f32 %v994, %v1269
    %v1271 = vand.u32 %v1270, 4294901760
    %1272 = vmatpush.msra.mxu0 %v1271
    %v1273 = vand.u32 %v993, 4294901760
    %v1274 = vsub.f32 %v993, %v1273
    %v1275 = vand.u32 %v1274, 4294901760
    %1276 = vmatpush.msra.mxu0 %v1275
    %v1277 = vand.u32 %v992, 4294901760
    %v1278 = vsub.f32 %v992, %v1277
    %v1279 = vand.u32 %v1278, 4294901760
    %1280 = vmatpush.msra.mxu0 %v1279
    %v1281 = vand.u32 %v991, 4294901760
    %v1282 = vsub.f32 %v991, %v1281
    %v1283 = vand.u32 %v1282, 4294901760
    %1284 = vmatpush.msra.mxu0 %v1283
    %v1285 = vand.u32 %v990, 4294901760
    %v1286 = vsub.f32 %v990, %v1285
    %v1287 = vand.u32 %v1286, 4294901760
    %1288 = vmatpush.msra.mxu0 %v1287
    %v1289 = vand.u32 %v989, 4294901760
    %v1290 = vsub.f32 %v989, %v1289
    %v1291 = vand.u32 %v1290, 4294901760
    %1292 = vmatpush.msra.mxu0 %v1291
    %v1293 = vand.u32 %v988, 4294901760
    %v1294 = vsub.f32 %v988, %v1293
    %v1295 = vand.u32 %v1294, 4294901760
    %1296 = vmatpush.msra.mxu0 %v1295
    %v1297 = vand.u32 %v987, 4294901760
    %v1298 = vsub.f32 %v987, %v1297
    %v1299 = vand.u32 %v1298, 4294901760
    %1300 = vmatpush.msra.mxu0 %v1299
    %v1301 = vand.u32 %v986, 4294901760
    %v1302 = vsub.f32 %v986, %v1301
    %v1303 = vand.u32 %v1302, 4294901760
    %1304 = vmatpush.msra.mxu0 %v1303
    %v1305 = vand.u32 %v985, 4294901760
    %1306 = vmatmul.f32.gmra.mxu0 %v1305
    %v1307 = vpop.f32.mrf.mxu0
    %v1308 = vadd.f32 %v1239, %v1307
    %1309 = vdwg.mxu0
    %v1310 = vand.u32 %v1001, 4294901760
    %1311 = vmatpush.msra.mxu0 %v1310
    %v1312 = vand.u32 %v1000, 4294901760
    %1313 = vmatpush.msra.mxu0 %v1312
    %v1314 = vand.u32 %v999, 4294901760
    %1315 = vmatpush.msra.mxu0 %v1314
    %v1316 = vand.u32 %v998, 4294901760
    %1317 = vmatpush.msra.mxu0 %v1316
    %v1318 = vand.u32 %v997, 4294901760
    %1319 = vmatpush.msra.mxu0 %v1318
    %v1320 = vand.u32 %v996, 4294901760
    %1321 = vmatpush.msra.mxu0 %v1320
    %v1322 = vand.u32 %v995, 4294901760
    %1323 = vmatpush.msra.mxu0 %v1322
    %v1324 = vand.u32 %v994, 4294901760
    %1325 = vmatpush.msra.mxu0 %v1324
    %v1326 = vand.u32 %v993, 4294901760
    %1327 = vmatpush.msra.mxu0 %v1326
    %v1328 = vand.u32 %v992, 4294901760
    %1329 = vmatpush.msra.mxu0 %v1328
    %v1330 = vand.u32 %v991, 4294901760
    %1331 = vmatpush.msra.mxu0 %v1330
    %v1332 = vand.u32 %v990, 4294901760
    %1333 = vmatpush.msra.mxu0 %v1332
    %v1334 = vand.u32 %v989, 4294901760
    %1335 = vmatpush.msra.mxu0 %v1334
    %v1336 = vand.u32 %v988, 4294901760
    %1337 = vmatpush.msra.mxu0 %v1336
    %v1338 = vand.u32 %v987, 4294901760
    %1339 = vmatpush.msra.mxu0 %v1338
    %v1340 = vand.u32 %v986, 4294901760
    %1341 = vmatpush.msra.mxu0 %v1340
    %v1342 = vand.u32 %v985, 4294901760
    %1343 = vmatmul.f32.gmra.mxu0 %v1342
    %v1344 = vpop.f32.mrf.mxu0
    %v1345 = vadd.f32 %v1308, %v1344
    %1346 = vdwg.mxu0
    %v1347 = vtanh.pop %v1345
    %1348 = vst.msk [vmem:[#allocation7] sm:$0xff] %vm72, %v1347
    // Predicated region
    $region46: #{_forward_impl.1} parent=1 // pred_check
      _
    $region47: #{_forward_impl.1} parent=1 // pred_check_branch
      %1350 = sbr.rel (0) target = $region49
    $region48: #{_forward_impl.1} parent=1 // pred_region
      %1352 = vsyncadd [#allocation4], 0
      %s1354 = sshll.u32 [#allocation7], 4
      %s1355 = int_to_ptr.vmem [resolvable:$true] %s1354
      %s1356 = sshll.u32 %s9, 4
      %s1357 = int_to_ptr.hbm [resolvable:$true] %s1356
      %1359 = dma.vmem_to_hbm [thread:$0]  %s1355, 128, %s1357, [#allocation4]
    $region49: #{_forward_impl.1} parent=1 // pred_fallthru
      _
    // Predicated region
    $region50: #{_forward_impl.1} parent=1 // pred_check
      _
    $region51: #{_forward_impl.1} parent=1 // pred_check_branch
      %1361 = sbr.rel (0) target = $region53
    $region52: #{_forward_impl.1} parent=1 // pred_region
      %1363 = dma.done [#allocation4], 128
    $region53: #{_forward_impl.1} parent=1 // pred_fallthru
      _
    %1364 = vsyncpa [#allocation3], 1
    %1365 = vsyncpa [#allocation6], 1
    %1366 = vsyncpa [#allocation4], 1

</llo_original>
